<compile_context>
chip_gen: v7x
topology: tpu7x:2x2x1
jax: 0.10.0
libtpu: 0.0.40
codegen_flags: <defaults>
</compile_context>

<pallas_src>
import functools

import jax
import jax.numpy as jnp
from jax.experimental import pallas as pl
from jax.experimental.pallas import tpu as pltpu

POS_PAD = 128  # pos_rel column block of the fused RHS gets its own 128-lane slot


def decoder_kernel(last_pos_ref, ctx_ref,
                   w_init_ref, w_big_ref, w_fused_ref,
                   b_gate_ref, b_gate_fold_ref, b_pos_ref,
                   out_ref,
                   *, seq_len, h_dim):
    H = h_dim
    G = 4 * H                                         # unpadded gate width (256)

    last_pos = last_pos_ref[...]                      # (BT, 2)
    ctx = ctx_ref[...]                                # (BT, H)
    h = ctx                                           # initial hidden = context
    c = ctx                                           # initial cell   = context

    w_big = w_big_ref[...]                            # (H, G + POS_PAD)
    wf = w_fused_ref[...]                             # (2, G)
    wf_x = wf[0:1, :]
    wf_y = wf[1:2, :]
    b_pos = b_pos_ref[...]                            # (1, 2)

    # One prologue matmul: ctx @ [w_ctx | w_hh_plain] -> loop-invariant context
    # gate contribution and the h-part of the step-0 gates.
    init = jnp.dot(ctx, w_init_ref[...], preferred_element_type=jnp.float32)
    ctx_gate = init[:, 0:G]                           # ctx @ w_ctx  (loop-invariant)
    b_total = ctx_gate + b_gate_ref[...]              # step-0 bias
    b_total_fold = ctx_gate + b_gate_fold_ref[...]    # steps >= 1 (pos-fold) bias

    # Step-0 gate pre-activations (uses the UNFOLDED w_hh from w_init).
    gates = (init[:, G:2 * G]
             + last_pos[:, 0:1] * wf_x + last_pos[:, 1:2] * wf_y
             + b_total)

    # seq_len is small and static -> fully unrolled recurrence.
    # (For seq_len >~ 16 switch to lax.fori_loop(..., unroll=True) carrying
    #  (h, c, last_pos, gates) to bound vreg live ranges.)
    outs = []
    for t in range(seq_len):
        # LSTM cell update; gate column order is (i, f, o, g), unpadded.
        sig = jax.nn.sigmoid(gates[:, 0:3 * H])       # one batched sigmoid
        i_g = sig[:, 0 * H:1 * H]
        f_g = sig[:, 1 * H:2 * H]
        o_g = sig[:, 2 * H:3 * H]
        g_g = jnp.tanh(gates[:, 3 * H:4 * H])
        c = f_g * c + i_g * g_g
        h = o_g * jnp.tanh(c)

        # Single MXU push per step: columns [ w_hh_fold (G) | w_pos (2, padded) ].
        big = jnp.dot(h, w_big, preferred_element_type=jnp.float32)

        pos_rel = big[:, G:G + 2] + b_pos             # hidden2pos, fused

        if t + 1 < seq_len:
            # Next-step gates use the OLD last_pos; the pos_rel contribution is
            # already folded into w_hh_fold / b_gate_fold.  K=2 stays on the VPU.
            gates = (big[:, 0:G]
                     + last_pos[:, 0:1] * wf_x + last_pos[:, 1:2] * wf_y
                     + b_total_fold)

        last_pos = last_pos + pos_rel                 # relative_to_abs (cumsum)
        outs.append(last_pos)
        outs.append(pos_rel)

    # Coalesced writeback: one store of (BT, 4*seq_len), columns per step are
    # [abs_x, abs_y, rel_x, rel_y].
    out_ref[...] = jnp.concatenate(outs, axis=-1)


def _reorder_gates(w, h_dim):
    """Reorder PyTorch gate columns (i, f, g, o) -> (i, f, o, g), unpadded."""
    H = h_dim
    i = w[..., 0 * H:1 * H]
    f = w[..., 1 * H:2 * H]
    g = w[..., 2 * H:3 * H]
    o = w[..., 3 * H:4 * H]
    return jnp.concatenate([i, f, o, g], axis=-1)


def decoder_forward(last_pos, context, params, *, seq_len, h_dim):
    """last_pos: (B, 2); context: (num_layers=1, B, H).
    Returns (pred_traj_fake, pred_traj_fake_rel), each (seq_len, B, 2)."""
    B = last_pos.shape[0]
    ctx = context[0]                                  # squeeze num_layers == 1
    H = h_dim
    G = 4 * H
    emb_dim = params["w_ih"].shape[0] - H

    # ---- one-time algebraic fusion (outside the recurrence) ----
    w_ih_r = _reorder_gates(params["w_ih"], H)        # (input_dim, G)
    w_ih_emb = w_ih_r[:emb_dim, :]                    # rows multiplying `emb`
    w_ctx = w_ih_r[emb_dim:, :]                       # rows multiplying `context`
    w_hh_r = _reorder_gates(params["w_hh"], H)        # (H, G)

    w_fused = params["w_emb"] @ w_ih_emb              # (2, G)  spatial_embedding fold
    b_gate = (_reorder_gates(params["b_ih"] + params["b_hh"], H)
              + params["b_emb"] @ w_ih_emb)           # (1, G)

    # Deferred-pos fold: gates_{t+1} = last_pos_t @ w_fused
    #                               + h_t @ (w_hh + w_pos @ w_fused)
    #                               + (b_gate + b_pos @ w_fused) + ctx @ w_ctx
    w_hh_fold = w_hh_r + params["w_pos"] @ w_fused    # (H, G)
    b_gate_fold = b_gate + params["b_pos"] @ w_fused  # (1, G)

    w_pos_pad = jnp.zeros((H, POS_PAD), jnp.float32).at[:, 0:2].set(params["w_pos"])
    w_big = jnp.concatenate([w_hh_fold, w_pos_pad], axis=1)   # (H, G + 128)
    w_init = jnp.concatenate([w_ctx, w_hh_r], axis=1)         # (H, 2G) prologue RHS

    # ---- batch padding + batch grid tiling ----
    Bp = max(8, ((B + 7) // 8) * 8)
    BT = Bp if Bp <= 128 else 128                     # per-core batch tile
    if Bp % BT:
        Bp = ((Bp + BT - 1) // BT) * BT
    nb = Bp // BT

    last_pos_p = jnp.zeros((Bp, 2), jnp.float32).at[:B].set(last_pos)
    ctx_p = jnp.zeros((Bp, H), jnp.float32).at[:B].set(ctx)

    batched = lambda shape: pl.BlockSpec(shape, lambda b: (b, 0))
    const = lambda arr: pl.BlockSpec(arr.shape, lambda b: (0, 0))

    kernel = functools.partial(decoder_kernel, seq_len=seq_len, h_dim=H)
    out = pl.pallas_call(
        kernel,
        out_shape=jax.ShapeDtypeStruct((Bp, 4 * seq_len), jnp.float32),
        grid=(nb,),
        in_specs=[batched((BT, 2)), batched((BT, H)),
                  const(w_init), const(w_big), const(w_fused),
                  const(b_gate), const(b_gate_fold), const(params["b_pos"])],
        out_specs=batched((BT, 4 * seq_len)),
        compiler_params=pltpu.CompilerParams(dimension_semantics=("parallel",)),
    )(last_pos_p, ctx_p, w_init, w_big, w_fused, b_gate, b_gate_fold,
      params["b_pos"])

    out3 = out[:B].reshape(B, seq_len, 4)
    pred_abs = jnp.transpose(out3[:, :, 0:2], (1, 0, 2))   # (seq_len, B, 2)
    pred_rel = jnp.transpose(out3[:, :, 2:4], (1, 0, 2))   # (seq_len, B, 2)
    return pred_abs, pred_rel


def reference_forward(last_pos, context, params, *, seq_len, h_dim):
    """Pure-JAX reference matching the PyTorch Decoder.forward semantics."""
    ctx = context[0]
    h = ctx
    c = ctx
    H = h_dim
    abs_list, rel_list = [], []
    for _ in range(seq_len):
        emb = last_pos @ params["w_emb"] + params["b_emb"]
        x = jnp.concatenate([emb, ctx], axis=-1)
        gates = (x @ params["w_ih"] + params["b_ih"]
                 + h @ params["w_hh"] + params["b_hh"])
        i_g = jax.nn.sigmoid(gates[:, 0 * H:1 * H])
        f_g = jax.nn.sigmoid(gates[:, 1 * H:2 * H])
        g_g = jnp.tanh(gates[:, 2 * H:3 * H])
        o_g = jax.nn.sigmoid(gates[:, 3 * H:4 * H])
        c = f_g * c + i_g * g_g
        h = o_g * jnp.tanh(c)
        pos_rel = h @ params["w_pos"] + params["b_pos"]
        last_pos = last_pos + pos_rel
        abs_list.append(last_pos)
        rel_list.append(pos_rel)
    return jnp.stack(abs_list, axis=0), jnp.stack(rel_list, axis=0)


def init_params(key, *, input_dim, h_dim):
    """Deterministic synthetic parameters with PyTorch-like uniform init scales.
    Weights stored (in_features, out_features); LSTM gate order (i, f, g, o)."""
    emb_dim = input_dim - h_dim  # cat([emb, context]) must equal input_dim
    ks = jax.random.split(key, 8)

    def unif(k, shape, fan_in):
        bound = 1.0 / jnp.sqrt(jnp.float32(fan_in))
        return jax.random.uniform(k, shape, jnp.float32, -bound, bound)

    return {
        # spatial_embedding: Linear(2, emb_dim)
        "w_emb": unif(ks[0], (2, emb_dim), 2),
        "b_emb": unif(ks[1], (1, emb_dim), 2),
        # LSTM(input_dim, h_dim, 1): weights stored (in, 4H)
        "w_ih": unif(ks[2], (input_dim, 4 * h_dim), h_dim),
        "b_ih": unif(ks[3], (1, 4 * h_dim), h_dim),
        "w_hh": unif(ks[4], (h_dim, 4 * h_dim), h_dim),
        "b_hh": unif(ks[5], (1, 4 * h_dim), h_dim),
        # hidden2pos: MLP([h_dim, 2]) == single Linear(h_dim, 2)
        "w_pos": unif(ks[6], (h_dim, 2), h_dim),
        "b_pos": unif(ks[7], (1, 2), h_dim),
    }


if __name__ == "__main__":
    seq_len = 8
    batch = 4
    h_dim = 64
    input_dim = 128  # => spatial embedding dim = 64

    key = jax.random.PRNGKey(0)
    k_params, k_pos, k_ctx = jax.random.split(key, 3)

    params = init_params(k_params, input_dim=input_dim, h_dim=h_dim)
    last_pos = jax.random.normal(k_pos, (batch, 2), jnp.float32)
    context = jax.random.normal(k_ctx, (1, batch, h_dim), jnp.float32)  # (num_layers, B, H)

    pred_abs, pred_rel = decoder_forward(last_pos, context, params,
                                         seq_len=seq_len, h_dim=h_dim)
    jax.block_until_ready((pred_abs, pred_rel))

    ref_abs, ref_rel = reference_forward(last_pos, context, params,
                                         seq_len=seq_len, h_dim=h_dim)
    assert pred_abs.shape == (seq_len, batch, 2)
    assert pred_rel.shape == (seq_len, batch, 2)
    assert jnp.allclose(pred_abs, ref_abs, rtol=1e-3, atol=1e-3)
    assert jnp.allclose(pred_rel, ref_rel, rtol=1e-3, atol=1e-3)

    print("KERNEL_OK")
</pallas_src>

<mosaic_0001>
module attributes {stable_mosaic.version = 11 : i64} {
  func.func @decoder_kernel(%arg0: i32, %arg1: memref<8x2xf32, #tpu.memory_space<vmem>>, %arg2: memref<8x64xf32, #tpu.memory_space<vmem>>, %arg3: memref<64x512xf32, #tpu.memory_space<vmem>>, %arg4: memref<64x384xf32, #tpu.memory_space<vmem>>, %arg5: memref<2x256xf32, #tpu.memory_space<vmem>>, %arg6: memref<1x256xf32, #tpu.memory_space<vmem>>, %arg7: memref<1x256xf32, #tpu.memory_space<vmem>>, %arg8: memref<1x2xf32, #tpu.memory_space<vmem>>, %arg9: memref<8x32xf32, #tpu.memory_space<vmem>>) attributes {dimension_semantics = [#tpu.dimension_semantics<parallel>], iteration_bounds = array<i64: 1>, scalar_prefetch = 0 : i64, scratch_operands = 0 : i64, tpu.core_type = #tpu.core_type<tc>, window_params = [{transform_indices = @transform_0, window_bounds = array<i64: 8, 2>}, {transform_indices = @transform_1, window_bounds = array<i64: 8, 64>}, {pipeline_mode = #tpu.pipeline_mode<synchronous>, transform_indices = @transform_2, window_bounds = array<i64: 64, 512>}, {pipeline_mode = #tpu.pipeline_mode<synchronous>, transform_indices = @transform_3, window_bounds = array<i64: 64, 384>}, {pipeline_mode = #tpu.pipeline_mode<synchronous>, transform_indices = @transform_4, window_bounds = array<i64: 2, 256>}, {pipeline_mode = #tpu.pipeline_mode<synchronous>, transform_indices = @transform_5, window_bounds = array<i64: 1, 256>}, {pipeline_mode = #tpu.pipeline_mode<synchronous>, transform_indices = @transform_6, window_bounds = array<i64: 1, 256>}, {pipeline_mode = #tpu.pipeline_mode<synchronous>, transform_indices = @transform_7, window_bounds = array<i64: 1, 2>}, {transform_indices = @transform_8, window_bounds = array<i64: 8, 32>}]} {
    %c0 = arith.constant 0 : index
    %c0_0 = arith.constant 0 : index
    %0 = vector.load %arg1[%c0, %c0_0] : memref<8x2xf32, #tpu.memory_space<vmem>>, vector<8x2xf32>
    %c0_1 = arith.constant 0 : index
    %c0_2 = arith.constant 0 : index
    %1 = vector.load %arg2[%c0_1, %c0_2] : memref<8x64xf32, #tpu.memory_space<vmem>>, vector<8x64xf32>
    %c0_3 = arith.constant 0 : index
    %c0_4 = arith.constant 0 : index
    %2 = vector.load %arg4[%c0_3, %c0_4] : memref<64x384xf32, #tpu.memory_space<vmem>>, vector<64x384xf32>
    %c0_5 = arith.constant 0 : index
    %c0_6 = arith.constant 0 : index
    %3 = vector.load %arg5[%c0_5, %c0_6] : memref<2x256xf32, #tpu.memory_space<vmem>>, vector<2x256xf32>
    %4 = vector.extract_strided_slice %3 {offsets = [0, 0], sizes = [1, 256], strides = [1, 1]} : vector<2x256xf32> to vector<1x256xf32>
    %5 = vector.extract_strided_slice %3 {offsets = [1, 0], sizes = [1, 256], strides = [1, 1]} : vector<2x256xf32> to vector<1x256xf32>
    %c0_7 = arith.constant 0 : index
    %c0_8 = arith.constant 0 : index
    %6 = vector.load %arg8[%c0_7, %c0_8] : memref<1x2xf32, #tpu.memory_space<vmem>>, vector<1x2xf32>
    %c0_9 = arith.constant 0 : index
    %c0_10 = arith.constant 0 : index
    %7 = vector.load %arg3[%c0_9, %c0_10] : memref<64x512xf32, #tpu.memory_space<vmem>>, vector<64x512xf32>
    %cst = arith.constant dense<0.000000e+00> : vector<8x512xf32>
    %8 = tpu.matmul %1, %7, %cst {dimension_numbers = #tpu.dot_dimension_numbers<[1], [0], [0], [1], [0, 0, 1, 1], [], []>} : vector<8x64xf32>, vector<64x512xf32>, vector<8x512xf32> -> vector<8x512xf32>
    %9 = vector.extract_strided_slice %8 {offsets = [0, 0], sizes = [8, 256], strides = [1, 1]} : vector<8x512xf32> to vector<8x256xf32>
    %c0_11 = arith.constant 0 : index
    %c0_12 = arith.constant 0 : index
    %10 = vector.load %arg6[%c0_11, %c0_12] : memref<1x256xf32, #tpu.memory_space<vmem>>, vector<1x256xf32>
    %11 = vector.broadcast %10 : vector<1x256xf32> to vector<8x256xf32>
    %12 = arith.addf %9, %11 : vector<8x256xf32>
    %c0_13 = arith.constant 0 : index
    %c0_14 = arith.constant 0 : index
    %13 = vector.load %arg7[%c0_13, %c0_14] : memref<1x256xf32, #tpu.memory_space<vmem>>, vector<1x256xf32>
    %14 = vector.broadcast %13 : vector<1x256xf32> to vector<8x256xf32>
    %15 = arith.addf %9, %14 : vector<8x256xf32>
    %16 = vector.extract_strided_slice %8 {offsets = [0, 256], sizes = [8, 256], strides = [1, 1]} : vector<8x512xf32> to vector<8x256xf32>
    %17 = vector.extract_strided_slice %0 {offsets = [0, 0], sizes = [8, 1], strides = [1, 1]} : vector<8x2xf32> to vector<8x1xf32>
    %18 = vector.broadcast %17 : vector<8x1xf32> to vector<8x256xf32>
    %19 = vector.broadcast %4 : vector<1x256xf32> to vector<8x256xf32>
    %20 = arith.mulf %18, %19 : vector<8x256xf32>
    %21 = arith.addf %16, %20 : vector<8x256xf32>
    %22 = vector.extract_strided_slice %0 {offsets = [0, 1], sizes = [8, 1], strides = [1, 1]} : vector<8x2xf32> to vector<8x1xf32>
    %23 = vector.broadcast %22 : vector<8x1xf32> to vector<8x256xf32>
    %24 = vector.broadcast %5 : vector<1x256xf32> to vector<8x256xf32>
    %25 = arith.mulf %23, %24 : vector<8x256xf32>
    %26 = arith.addf %21, %25 : vector<8x256xf32>
    %27 = arith.addf %26, %12 : vector<8x256xf32>
    %28 = vector.extract_strided_slice %27 {offsets = [0, 0], sizes = [8, 192], strides = [1, 1]} : vector<8x256xf32> to vector<8x192xf32>
    %29 = arith.negf %28 : vector<8x192xf32>
    %30 = math.exp %29 : vector<8x192xf32>
    %cst_15 = arith.constant 1.000000e+00 : f32
    %31 = vector.broadcast %cst_15 : f32 to vector<8x192xf32>
    %32 = arith.addf %31, %30 : vector<8x192xf32>
    %33 = arith.divf %31, %32 : vector<8x192xf32>
    %34 = vector.extract_strided_slice %33 {offsets = [0, 0], sizes = [8, 64], strides = [1, 1]} : vector<8x192xf32> to vector<8x64xf32>
    %35 = vector.extract_strided_slice %33 {offsets = [0, 64], sizes = [8, 64], strides = [1, 1]} : vector<8x192xf32> to vector<8x64xf32>
    %36 = vector.extract_strided_slice %33 {offsets = [0, 128], sizes = [8, 64], strides = [1, 1]} : vector<8x192xf32> to vector<8x64xf32>
    %37 = vector.extract_strided_slice %27 {offsets = [0, 192], sizes = [8, 64], strides = [1, 1]} : vector<8x256xf32> to vector<8x64xf32>
    %38 = math.tanh %37 : vector<8x64xf32>
    %39 = arith.mulf %35, %1 : vector<8x64xf32>
    %40 = arith.mulf %34, %38 : vector<8x64xf32>
    %41 = arith.addf %39, %40 : vector<8x64xf32>
    %42 = math.tanh %41 : vector<8x64xf32>
    %43 = arith.mulf %36, %42 : vector<8x64xf32>
    %cst_16 = arith.constant dense<0.000000e+00> : vector<8x384xf32>
    %44 = tpu.matmul %43, %2, %cst_16 {dimension_numbers = #tpu.dot_dimension_numbers<[1], [0], [0], [1], [0, 0, 1, 1], [], []>} : vector<8x64xf32>, vector<64x384xf32>, vector<8x384xf32> -> vector<8x384xf32>
    %45 = vector.extract_strided_slice %44 {offsets = [0, 256], sizes = [8, 2], strides = [1, 1]} : vector<8x384xf32> to vector<8x2xf32>
    %46 = vector.broadcast %6 : vector<1x2xf32> to vector<8x2xf32>
    %47 = arith.addf %45, %46 : vector<8x2xf32>
    %48 = vector.extract_strided_slice %44 {offsets = [0, 0], sizes = [8, 256], strides = [1, 1]} : vector<8x384xf32> to vector<8x256xf32>
    %49 = vector.extract_strided_slice %0 {offsets = [0, 0], sizes = [8, 1], strides = [1, 1]} : vector<8x2xf32> to vector<8x1xf32>
    %50 = vector.broadcast %49 : vector<8x1xf32> to vector<8x256xf32>
    %51 = vector.broadcast %4 : vector<1x256xf32> to vector<8x256xf32>
    %52 = arith.mulf %50, %51 : vector<8x256xf32>
    %53 = arith.addf %48, %52 : vector<8x256xf32>
    %54 = vector.extract_strided_slice %0 {offsets = [0, 1], sizes = [8, 1], strides = [1, 1]} : vector<8x2xf32> to vector<8x1xf32>
    %55 = vector.broadcast %54 : vector<8x1xf32> to vector<8x256xf32>
    %56 = vector.broadcast %5 : vector<1x256xf32> to vector<8x256xf32>
    %57 = arith.mulf %55, %56 : vector<8x256xf32>
    %58 = arith.addf %53, %57 : vector<8x256xf32>
    %59 = arith.addf %58, %15 : vector<8x256xf32>
    %60 = arith.addf %0, %47 : vector<8x2xf32>
    %61 = vector.extract_strided_slice %59 {offsets = [0, 0], sizes = [8, 192], strides = [1, 1]} : vector<8x256xf32> to vector<8x192xf32>
    %62 = arith.negf %61 : vector<8x192xf32>
    %63 = math.exp %62 : vector<8x192xf32>
    %cst_17 = arith.constant 1.000000e+00 : f32
    %64 = vector.broadcast %cst_17 : f32 to vector<8x192xf32>
    %65 = arith.addf %64, %63 : vector<8x192xf32>
    %66 = arith.divf %64, %65 : vector<8x192xf32>
    %67 = vector.extract_strided_slice %66 {offsets = [0, 0], sizes = [8, 64], strides = [1, 1]} : vector<8x192xf32> to vector<8x64xf32>
    %68 = vector.extract_strided_slice %66 {offsets = [0, 64], sizes = [8, 64], strides = [1, 1]} : vector<8x192xf32> to vector<8x64xf32>
    %69 = vector.extract_strided_slice %66 {offsets = [0, 128], sizes = [8, 64], strides = [1, 1]} : vector<8x192xf32> to vector<8x64xf32>
    %70 = vector.extract_strided_slice %59 {offsets = [0, 192], sizes = [8, 64], strides = [1, 1]} : vector<8x256xf32> to vector<8x64xf32>
    %71 = math.tanh %70 : vector<8x64xf32>
    %72 = arith.mulf %68, %41 : vector<8x64xf32>
    %73 = arith.mulf %67, %71 : vector<8x64xf32>
    %74 = arith.addf %72, %73 : vector<8x64xf32>
    %75 = math.tanh %74 : vector<8x64xf32>
    %76 = arith.mulf %69, %75 : vector<8x64xf32>
    %cst_18 = arith.constant dense<0.000000e+00> : vector<8x384xf32>
    %77 = tpu.matmul %76, %2, %cst_18 {dimension_numbers = #tpu.dot_dimension_numbers<[1], [0], [0], [1], [0, 0, 1, 1], [], []>} : vector<8x64xf32>, vector<64x384xf32>, vector<8x384xf32> -> vector<8x384xf32>
    %78 = vector.extract_strided_slice %77 {offsets = [0, 256], sizes = [8, 2], strides = [1, 1]} : vector<8x384xf32> to vector<8x2xf32>
    %79 = vector.broadcast %6 : vector<1x2xf32> to vector<8x2xf32>
    %80 = arith.addf %78, %79 : vector<8x2xf32>
    %81 = vector.extract_strided_slice %77 {offsets = [0, 0], sizes = [8, 256], strides = [1, 1]} : vector<8x384xf32> to vector<8x256xf32>
    %82 = vector.extract_strided_slice %60 {offsets = [0, 0], sizes = [8, 1], strides = [1, 1]} : vector<8x2xf32> to vector<8x1xf32>
    %83 = vector.broadcast %82 : vector<8x1xf32> to vector<8x256xf32>
    %84 = vector.broadcast %4 : vector<1x256xf32> to vector<8x256xf32>
    %85 = arith.mulf %83, %84 : vector<8x256xf32>
    %86 = arith.addf %81, %85 : vector<8x256xf32>
    %87 = vector.extract_strided_slice %60 {offsets = [0, 1], sizes = [8, 1], strides = [1, 1]} : vector<8x2xf32> to vector<8x1xf32>
    %88 = vector.broadcast %87 : vector<8x1xf32> to vector<8x256xf32>
    %89 = vector.broadcast %5 : vector<1x256xf32> to vector<8x256xf32>
    %90 = arith.mulf %88, %89 : vector<8x256xf32>
    %91 = arith.addf %86, %90 : vector<8x256xf32>
    %92 = arith.addf %91, %15 : vector<8x256xf32>
    %93 = arith.addf %60, %80 : vector<8x2xf32>
    %94 = vector.extract_strided_slice %92 {offsets = [0, 0], sizes = [8, 192], strides = [1, 1]} : vector<8x256xf32> to vector<8x192xf32>
    %95 = arith.negf %94 : vector<8x192xf32>
    %96 = math.exp %95 : vector<8x192xf32>
    %cst_19 = arith.constant 1.000000e+00 : f32
    %97 = vector.broadcast %cst_19 : f32 to vector<8x192xf32>
    %98 = arith.addf %97, %96 : vector<8x192xf32>
    %99 = arith.divf %97, %98 : vector<8x192xf32>
    %100 = vector.extract_strided_slice %99 {offsets = [0, 0], sizes = [8, 64], strides = [1, 1]} : vector<8x192xf32> to vector<8x64xf32>
    %101 = vector.extract_strided_slice %99 {offsets = [0, 64], sizes = [8, 64], strides = [1, 1]} : vector<8x192xf32> to vector<8x64xf32>
    %102 = vector.extract_strided_slice %99 {offsets = [0, 128], sizes = [8, 64], strides = [1, 1]} : vector<8x192xf32> to vector<8x64xf32>
    %103 = vector.extract_strided_slice %92 {offsets = [0, 192], sizes = [8, 64], strides = [1, 1]} : vector<8x256xf32> to vector<8x64xf32>
    %104 = math.tanh %103 : vector<8x64xf32>
    %105 = arith.mulf %101, %74 : vector<8x64xf32>
    %106 = arith.mulf %100, %104 : vector<8x64xf32>
    %107 = arith.addf %105, %106 : vector<8x64xf32>
    %108 = math.tanh %107 : vector<8x64xf32>
    %109 = arith.mulf %102, %108 : vector<8x64xf32>
    %cst_20 = arith.constant dense<0.000000e+00> : vector<8x384xf32>
    %110 = tpu.matmul %109, %2, %cst_20 {dimension_numbers = #tpu.dot_dimension_numbers<[1], [0], [0], [1], [0, 0, 1, 1], [], []>} : vector<8x64xf32>, vector<64x384xf32>, vector<8x384xf32> -> vector<8x384xf32>
    %111 = vector.extract_strided_slice %110 {offsets = [0, 256], sizes = [8, 2], strides = [1, 1]} : vector<8x384xf32> to vector<8x2xf32>
    %112 = vector.broadcast %6 : vector<1x2xf32> to vector<8x2xf32>
    %113 = arith.addf %111, %112 : vector<8x2xf32>
    %114 = vector.extract_strided_slice %110 {offsets = [0, 0], sizes = [8, 256], strides = [1, 1]} : vector<8x384xf32> to vector<8x256xf32>
    %115 = vector.extract_strided_slice %93 {offsets = [0, 0], sizes = [8, 1], strides = [1, 1]} : vector<8x2xf32> to vector<8x1xf32>
    %116 = vector.broadcast %115 : vector<8x1xf32> to vector<8x256xf32>
    %117 = vector.broadcast %4 : vector<1x256xf32> to vector<8x256xf32>
    %118 = arith.mulf %116, %117 : vector<8x256xf32>
    %119 = arith.addf %114, %118 : vector<8x256xf32>
    %120 = vector.extract_strided_slice %93 {offsets = [0, 1], sizes = [8, 1], strides = [1, 1]} : vector<8x2xf32> to vector<8x1xf32>
    %121 = vector.broadcast %120 : vector<8x1xf32> to vector<8x256xf32>
    %122 = vector.broadcast %5 : vector<1x256xf32> to vector<8x256xf32>
    %123 = arith.mulf %121, %122 : vector<8x256xf32>
    %124 = arith.addf %119, %123 : vector<8x256xf32>
    %125 = arith.addf %124, %15 : vector<8x256xf32>
    %126 = arith.addf %93, %113 : vector<8x2xf32>
    %127 = vector.extract_strided_slice %125 {offsets = [0, 0], sizes = [8, 192], strides = [1, 1]} : vector<8x256xf32> to vector<8x192xf32>
    %128 = arith.negf %127 : vector<8x192xf32>
    %129 = math.exp %128 : vector<8x192xf32>
    %cst_21 = arith.constant 1.000000e+00 : f32
    %130 = vector.broadcast %cst_21 : f32 to vector<8x192xf32>
    %131 = arith.addf %130, %129 : vector<8x192xf32>
    %132 = arith.divf %130, %131 : vector<8x192xf32>
    %133 = vector.extract_strided_slice %132 {offsets = [0, 0], sizes = [8, 64], strides = [1, 1]} : vector<8x192xf32> to vector<8x64xf32>
    %134 = vector.extract_strided_slice %132 {offsets = [0, 64], sizes = [8, 64], strides = [1, 1]} : vector<8x192xf32> to vector<8x64xf32>
    %135 = vector.extract_strided_slice %132 {offsets = [0, 128], sizes = [8, 64], strides = [1, 1]} : vector<8x192xf32> to vector<8x64xf32>
    %136 = vector.extract_strided_slice %125 {offsets = [0, 192], sizes = [8, 64], strides = [1, 1]} : vector<8x256xf32> to vector<8x64xf32>
    %137 = math.tanh %136 : vector<8x64xf32>
    %138 = arith.mulf %134, %107 : vector<8x64xf32>
    %139 = arith.mulf %133, %137 : vector<8x64xf32>
    %140 = arith.addf %138, %139 : vector<8x64xf32>
    %141 = math.tanh %140 : vector<8x64xf32>
    %142 = arith.mulf %135, %141 : vector<8x64xf32>
    %cst_22 = arith.constant dense<0.000000e+00> : vector<8x384xf32>
    %143 = tpu.matmul %142, %2, %cst_22 {dimension_numbers = #tpu.dot_dimension_numbers<[1], [0], [0], [1], [0, 0, 1, 1], [], []>} : vector<8x64xf32>, vector<64x384xf32>, vector<8x384xf32> -> vector<8x384xf32>
    %144 = vector.extract_strided_slice %143 {offsets = [0, 256], sizes = [8, 2], strides = [1, 1]} : vector<8x384xf32> to vector<8x2xf32>
    %145 = vector.broadcast %6 : vector<1x2xf32> to vector<8x2xf32>
    %146 = arith.addf %144, %145 : vector<8x2xf32>
    %147 = vector.extract_strided_slice %143 {offsets = [0, 0], sizes = [8, 256], strides = [1, 1]} : vector<8x384xf32> to vector<8x256xf32>
    %148 = vector.extract_strided_slice %126 {offsets = [0, 0], sizes = [8, 1], strides = [1, 1]} : vector<8x2xf32> to vector<8x1xf32>
    %149 = vector.broadcast %148 : vector<8x1xf32> to vector<8x256xf32>
    %150 = vector.broadcast %4 : vector<1x256xf32> to vector<8x256xf32>
    %151 = arith.mulf %149, %150 : vector<8x256xf32>
    %152 = arith.addf %147, %151 : vector<8x256xf32>
    %153 = vector.extract_strided_slice %126 {offsets = [0, 1], sizes = [8, 1], strides = [1, 1]} : vector<8x2xf32> to vector<8x1xf32>
    %154 = vector.broadcast %153 : vector<8x1xf32> to vector<8x256xf32>
    %155 = vector.broadcast %5 : vector<1x256xf32> to vector<8x256xf32>
    %156 = arith.mulf %154, %155 : vector<8x256xf32>
    %157 = arith.addf %152, %156 : vector<8x256xf32>
    %158 = arith.addf %157, %15 : vector<8x256xf32>
    %159 = arith.addf %126, %146 : vector<8x2xf32>
    %160 = vector.extract_strided_slice %158 {offsets = [0, 0], sizes = [8, 192], strides = [1, 1]} : vector<8x256xf32> to vector<8x192xf32>
    %161 = arith.negf %160 : vector<8x192xf32>
    %162 = math.exp %161 : vector<8x192xf32>
    %cst_23 = arith.constant 1.000000e+00 : f32
    %163 = vector.broadcast %cst_23 : f32 to vector<8x192xf32>
    %164 = arith.addf %163, %162 : vector<8x192xf32>
    %165 = arith.divf %163, %164 : vector<8x192xf32>
    %166 = vector.extract_strided_slice %165 {offsets = [0, 0], sizes = [8, 64], strides = [1, 1]} : vector<8x192xf32> to vector<8x64xf32>
    %167 = vector.extract_strided_slice %165 {offsets = [0, 64], sizes = [8, 64], strides = [1, 1]} : vector<8x192xf32> to vector<8x64xf32>
    %168 = vector.extract_strided_slice %165 {offsets = [0, 128], sizes = [8, 64], strides = [1, 1]} : vector<8x192xf32> to vector<8x64xf32>
    %169 = vector.extract_strided_slice %158 {offsets = [0, 192], sizes = [8, 64], strides = [1, 1]} : vector<8x256xf32> to vector<8x64xf32>
    %170 = math.tanh %169 : vector<8x64xf32>
    %171 = arith.mulf %167, %140 : vector<8x64xf32>
    %172 = arith.mulf %166, %170 : vector<8x64xf32>
    %173 = arith.addf %171, %172 : vector<8x64xf32>
    %174 = math.tanh %173 : vector<8x64xf32>
    %175 = arith.mulf %168, %174 : vector<8x64xf32>
    %cst_24 = arith.constant dense<0.000000e+00> : vector<8x384xf32>
    %176 = tpu.matmul %175, %2, %cst_24 {dimension_numbers = #tpu.dot_dimension_numbers<[1], [0], [0], [1], [0, 0, 1, 1], [], []>} : vector<8x64xf32>, vector<64x384xf32>, vector<8x384xf32> -> vector<8x384xf32>
    %177 = vector.extract_strided_slice %176 {offsets = [0, 256], sizes = [8, 2], strides = [1, 1]} : vector<8x384xf32> to vector<8x2xf32>
    %178 = vector.broadcast %6 : vector<1x2xf32> to vector<8x2xf32>
    %179 = arith.addf %177, %178 : vector<8x2xf32>
    %180 = vector.extract_strided_slice %176 {offsets = [0, 0], sizes = [8, 256], strides = [1, 1]} : vector<8x384xf32> to vector<8x256xf32>
    %181 = vector.extract_strided_slice %159 {offsets = [0, 0], sizes = [8, 1], strides = [1, 1]} : vector<8x2xf32> to vector<8x1xf32>
    %182 = vector.broadcast %181 : vector<8x1xf32> to vector<8x256xf32>
    %183 = vector.broadcast %4 : vector<1x256xf32> to vector<8x256xf32>
    %184 = arith.mulf %182, %183 : vector<8x256xf32>
    %185 = arith.addf %180, %184 : vector<8x256xf32>
    %186 = vector.extract_strided_slice %159 {offsets = [0, 1], sizes = [8, 1], strides = [1, 1]} : vector<8x2xf32> to vector<8x1xf32>
    %187 = vector.broadcast %186 : vector<8x1xf32> to vector<8x256xf32>
    %188 = vector.broadcast %5 : vector<1x256xf32> to vector<8x256xf32>
    %189 = arith.mulf %187, %188 : vector<8x256xf32>
    %190 = arith.addf %185, %189 : vector<8x256xf32>
    %191 = arith.addf %190, %15 : vector<8x256xf32>
    %192 = arith.addf %159, %179 : vector<8x2xf32>
    %193 = vector.extract_strided_slice %191 {offsets = [0, 0], sizes = [8, 192], strides = [1, 1]} : vector<8x256xf32> to vector<8x192xf32>
    %194 = arith.negf %193 : vector<8x192xf32>
    %195 = math.exp %194 : vector<8x192xf32>
    %cst_25 = arith.constant 1.000000e+00 : f32
    %196 = vector.broadcast %cst_25 : f32 to vector<8x192xf32>
    %197 = arith.addf %196, %195 : vector<8x192xf32>
    %198 = arith.divf %196, %197 : vector<8x192xf32>
    %199 = vector.extract_strided_slice %198 {offsets = [0, 0], sizes = [8, 64], strides = [1, 1]} : vector<8x192xf32> to vector<8x64xf32>
    %200 = vector.extract_strided_slice %198 {offsets = [0, 64], sizes = [8, 64], strides = [1, 1]} : vector<8x192xf32> to vector<8x64xf32>
    %201 = vector.extract_strided_slice %198 {offsets = [0, 128], sizes = [8, 64], strides = [1, 1]} : vector<8x192xf32> to vector<8x64xf32>
    %202 = vector.extract_strided_slice %191 {offsets = [0, 192], sizes = [8, 64], strides = [1, 1]} : vector<8x256xf32> to vector<8x64xf32>
    %203 = math.tanh %202 : vector<8x64xf32>
    %204 = arith.mulf %200, %173 : vector<8x64xf32>
    %205 = arith.mulf %199, %203 : vector<8x64xf32>
    %206 = arith.addf %204, %205 : vector<8x64xf32>
    %207 = math.tanh %206 : vector<8x64xf32>
    %208 = arith.mulf %201, %207 : vector<8x64xf32>
    %cst_26 = arith.constant dense<0.000000e+00> : vector<8x384xf32>
    %209 = tpu.matmul %208, %2, %cst_26 {dimension_numbers = #tpu.dot_dimension_numbers<[1], [0], [0], [1], [0, 0, 1, 1], [], []>} : vector<8x64xf32>, vector<64x384xf32>, vector<8x384xf32> -> vector<8x384xf32>
    %210 = vector.extract_strided_slice %209 {offsets = [0, 256], sizes = [8, 2], strides = [1, 1]} : vector<8x384xf32> to vector<8x2xf32>
    %211 = vector.broadcast %6 : vector<1x2xf32> to vector<8x2xf32>
    %212 = arith.addf %210, %211 : vector<8x2xf32>
    %213 = vector.extract_strided_slice %209 {offsets = [0, 0], sizes = [8, 256], strides = [1, 1]} : vector<8x384xf32> to vector<8x256xf32>
    %214 = vector.extract_strided_slice %192 {offsets = [0, 0], sizes = [8, 1], strides = [1, 1]} : vector<8x2xf32> to vector<8x1xf32>
    %215 = vector.broadcast %214 : vector<8x1xf32> to vector<8x256xf32>
    %216 = vector.broadcast %4 : vector<1x256xf32> to vector<8x256xf32>
    %217 = arith.mulf %215, %216 : vector<8x256xf32>
    %218 = arith.addf %213, %217 : vector<8x256xf32>
    %219 = vector.extract_strided_slice %192 {offsets = [0, 1], sizes = [8, 1], strides = [1, 1]} : vector<8x2xf32> to vector<8x1xf32>
    %220 = vector.broadcast %219 : vector<8x1xf32> to vector<8x256xf32>
    %221 = vector.broadcast %5 : vector<1x256xf32> to vector<8x256xf32>
    %222 = arith.mulf %220, %221 : vector<8x256xf32>
    %223 = arith.addf %218, %222 : vector<8x256xf32>
    %224 = arith.addf %223, %15 : vector<8x256xf32>
    %225 = arith.addf %192, %212 : vector<8x2xf32>
    %226 = vector.extract_strided_slice %224 {offsets = [0, 0], sizes = [8, 192], strides = [1, 1]} : vector<8x256xf32> to vector<8x192xf32>
    %227 = arith.negf %226 : vector<8x192xf32>
    %228 = math.exp %227 : vector<8x192xf32>
    %cst_27 = arith.constant 1.000000e+00 : f32
    %229 = vector.broadcast %cst_27 : f32 to vector<8x192xf32>
    %230 = arith.addf %229, %228 : vector<8x192xf32>
    %231 = arith.divf %229, %230 : vector<8x192xf32>
    %232 = vector.extract_strided_slice %231 {offsets = [0, 0], sizes = [8, 64], strides = [1, 1]} : vector<8x192xf32> to vector<8x64xf32>
    %233 = vector.extract_strided_slice %231 {offsets = [0, 64], sizes = [8, 64], strides = [1, 1]} : vector<8x192xf32> to vector<8x64xf32>
    %234 = vector.extract_strided_slice %231 {offsets = [0, 128], sizes = [8, 64], strides = [1, 1]} : vector<8x192xf32> to vector<8x64xf32>
    %235 = vector.extract_strided_slice %224 {offsets = [0, 192], sizes = [8, 64], strides = [1, 1]} : vector<8x256xf32> to vector<8x64xf32>
    %236 = math.tanh %235 : vector<8x64xf32>
    %237 = arith.mulf %233, %206 : vector<8x64xf32>
    %238 = arith.mulf %232, %236 : vector<8x64xf32>
    %239 = arith.addf %237, %238 : vector<8x64xf32>
    %240 = math.tanh %239 : vector<8x64xf32>
    %241 = arith.mulf %234, %240 : vector<8x64xf32>
    %cst_28 = arith.constant dense<0.000000e+00> : vector<8x384xf32>
    %242 = tpu.matmul %241, %2, %cst_28 {dimension_numbers = #tpu.dot_dimension_numbers<[1], [0], [0], [1], [0, 0, 1, 1], [], []>} : vector<8x64xf32>, vector<64x384xf32>, vector<8x384xf32> -> vector<8x384xf32>
    %243 = vector.extract_strided_slice %242 {offsets = [0, 256], sizes = [8, 2], strides = [1, 1]} : vector<8x384xf32> to vector<8x2xf32>
    %244 = vector.broadcast %6 : vector<1x2xf32> to vector<8x2xf32>
    %245 = arith.addf %243, %244 : vector<8x2xf32>
    %246 = vector.extract_strided_slice %242 {offsets = [0, 0], sizes = [8, 256], strides = [1, 1]} : vector<8x384xf32> to vector<8x256xf32>
    %247 = vector.extract_strided_slice %225 {offsets = [0, 0], sizes = [8, 1], strides = [1, 1]} : vector<8x2xf32> to vector<8x1xf32>
    %248 = vector.broadcast %247 : vector<8x1xf32> to vector<8x256xf32>
    %249 = vector.broadcast %4 : vector<1x256xf32> to vector<8x256xf32>
    %250 = arith.mulf %248, %249 : vector<8x256xf32>
    %251 = arith.addf %246, %250 : vector<8x256xf32>
    %252 = vector.extract_strided_slice %225 {offsets = [0, 1], sizes = [8, 1], strides = [1, 1]} : vector<8x2xf32> to vector<8x1xf32>
    %253 = vector.broadcast %252 : vector<8x1xf32> to vector<8x256xf32>
    %254 = vector.broadcast %5 : vector<1x256xf32> to vector<8x256xf32>
    %255 = arith.mulf %253, %254 : vector<8x256xf32>
    %256 = arith.addf %251, %255 : vector<8x256xf32>
    %257 = arith.addf %256, %15 : vector<8x256xf32>
    %258 = arith.addf %225, %245 : vector<8x2xf32>
    %259 = vector.extract_strided_slice %257 {offsets = [0, 0], sizes = [8, 192], strides = [1, 1]} : vector<8x256xf32> to vector<8x192xf32>
    %260 = arith.negf %259 : vector<8x192xf32>
    %261 = math.exp %260 : vector<8x192xf32>
    %cst_29 = arith.constant 1.000000e+00 : f32
    %262 = vector.broadcast %cst_29 : f32 to vector<8x192xf32>
    %263 = arith.addf %262, %261 : vector<8x192xf32>
    %264 = arith.divf %262, %263 : vector<8x192xf32>
    %265 = vector.extract_strided_slice %264 {offsets = [0, 0], sizes = [8, 64], strides = [1, 1]} : vector<8x192xf32> to vector<8x64xf32>
    %266 = vector.extract_strided_slice %264 {offsets = [0, 64], sizes = [8, 64], strides = [1, 1]} : vector<8x192xf32> to vector<8x64xf32>
    %267 = vector.extract_strided_slice %264 {offsets = [0, 128], sizes = [8, 64], strides = [1, 1]} : vector<8x192xf32> to vector<8x64xf32>
    %268 = vector.extract_strided_slice %257 {offsets = [0, 192], sizes = [8, 64], strides = [1, 1]} : vector<8x256xf32> to vector<8x64xf32>
    %269 = math.tanh %268 : vector<8x64xf32>
    %270 = arith.mulf %266, %239 : vector<8x64xf32>
    %271 = arith.mulf %265, %269 : vector<8x64xf32>
    %272 = arith.addf %270, %271 : vector<8x64xf32>
    %273 = math.tanh %272 : vector<8x64xf32>
    %274 = arith.mulf %267, %273 : vector<8x64xf32>
    %cst_30 = arith.constant dense<0.000000e+00> : vector<8x384xf32>
    %275 = tpu.matmul %274, %2, %cst_30 {dimension_numbers = #tpu.dot_dimension_numbers<[1], [0], [0], [1], [0, 0, 1, 1], [], []>} : vector<8x64xf32>, vector<64x384xf32>, vector<8x384xf32> -> vector<8x384xf32>
    %276 = vector.extract_strided_slice %275 {offsets = [0, 256], sizes = [8, 2], strides = [1, 1]} : vector<8x384xf32> to vector<8x2xf32>
    %277 = vector.broadcast %6 : vector<1x2xf32> to vector<8x2xf32>
    %278 = arith.addf %276, %277 : vector<8x2xf32>
    %279 = arith.addf %258, %278 : vector<8x2xf32>
    %280 = tpu.concatenate %60, %47, %93, %80, %126, %113, %159, %146, %192, %179, %225, %212, %258, %245, %279, %278 in 1 : vector<8x2xf32>, vector<8x2xf32>, vector<8x2xf32>, vector<8x2xf32>, vector<8x2xf32>, vector<8x2xf32>, vector<8x2xf32>, vector<8x2xf32>, vector<8x2xf32>, vector<8x2xf32>, vector<8x2xf32>, vector<8x2xf32>, vector<8x2xf32>, vector<8x2xf32>, vector<8x2xf32>, vector<8x2xf32> -> vector<8x32xf32>
    %c0_31 = arith.constant 0 : index
    %c0_32 = arith.constant 0 : index
    %281 = vector.load %arg9[%c0_31, %c0_32] : memref<8x32xf32, #tpu.memory_space<vmem>>, vector<8x32xf32>
    tpu.vector_store %arg9[%c0_31, %c0_32], %280 {strides = array<i32>} : memref<8x32xf32, #tpu.memory_space<vmem>>, vector<8x32xf32>,
    return
  }
  func.func @transform_0(%arg0: i32) -> (i32, i32) {
    %c0_i32 = arith.constant 0 : i32
    %c0_i32_0 = arith.constant 0 : i32
    return %arg0, %c0_i32 : i32, i32
  }
  func.func @transform_1(%arg0: i32) -> (i32, i32) {
    %c0_i32 = arith.constant 0 : i32
    %c0_i32_0 = arith.constant 0 : i32
    return %arg0, %c0_i32 : i32, i32
  }
  func.func @transform_2(%arg0: i32) -> (i32, i32) {
    %c0_i32 = arith.constant 0 : i32
    %c0_i32_0 = arith.constant 0 : i32
    %c0_i32_1 = arith.constant 0 : i32
    return %c0_i32, %c0_i32_0 : i32, i32
  }
  func.func @transform_3(%arg0: i32) -> (i32, i32) {
    %c0_i32 = arith.constant 0 : i32
    %c0_i32_0 = arith.constant 0 : i32
    %c0_i32_1 = arith.constant 0 : i32
    return %c0_i32, %c0_i32_0 : i32, i32
  }
  func.func @transform_4(%arg0: i32) -> (i32, i32) {
    %c0_i32 = arith.constant 0 : i32
    %c0_i32_0 = arith.constant 0 : i32
    %c0_i32_1 = arith.constant 0 : i32
    return %c0_i32, %c0_i32_0 : i32, i32
  }
  func.func @transform_5(%arg0: i32) -> (i32, i32) {
    %c0_i32 = arith.constant 0 : i32
    %c0_i32_0 = arith.constant 0 : i32
    %c0_i32_1 = arith.constant 0 : i32
    return %c0_i32, %c0_i32_0 : i32, i32
  }
  func.func @transform_6(%arg0: i32) -> (i32, i32) {
    %c0_i32 = arith.constant 0 : i32
    %c0_i32_0 = arith.constant 0 : i32
    %c0_i32_1 = arith.constant 0 : i32
    return %c0_i32, %c0_i32_0 : i32, i32
  }
  func.func @transform_7(%arg0: i32) -> (i32, i32) {
    %c0_i32 = arith.constant 0 : i32
    %c0_i32_0 = arith.constant 0 : i32
    %c0_i32_1 = arith.constant 0 : i32
    return %c0_i32, %c0_i32_0 : i32, i32
  }
  func.func @transform_8(%arg0: i32) -> (i32, i32) {
    %c0_i32 = arith.constant 0 : i32
    %c0_i32_0 = arith.constant 0 : i32
    return %arg0, %c0_i32 : i32, i32
  }
}

</mosaic_0001>

<llo_original>
// kernel: tpu_custom_call.1
$region0: #{tpu_custom_call.1}
  #allocation0 [shape = 'u32[]', space=smem, size = 0x4, offset = 0x4, fixed_abs, tag = 'smem constant byte address 0x4 - core index']
  #allocation1 [shape = 'u32[144,128]{1,0:T(1,128)}', space=vmem, size = 0x12000, scoped, tag = 'internal scratch']
  %s0 = inlined_call_operand.vmem [shape: f32[8,2], index: 0, kind: input, shape index: {}]
  %s1 = inlined_call_operand.vmem [shape: f32[8,64], index: 1, kind: input, shape index: {}]
  %s2 = inlined_call_operand.hbm [shape: f32[64,512], index: 2, kind: input, shape index: {}]
  %s3 = inlined_call_operand.hbm [shape: f32[64,384], index: 3, kind: input, shape index: {}]
  %s4 = inlined_call_operand.vmem [shape: f32[2,256], index: 4, kind: input, shape index: {}]
  %s5 = inlined_call_operand.vmem [shape: f32[1,256], index: 5, kind: input, shape index: {}]
  %s6 = inlined_call_operand.vmem [shape: f32[1,256], index: 6, kind: input, shape index: {}]
  %s7 = inlined_call_operand.vmem [shape: f32[1,2], index: 7, kind: input, shape index: {}]
  %s8 = inlined_call_operand.hbm [shape: f32[8,32], index: 8, kind: output, shape index: {}]
  %s9 = sld [smem:[#allocation0]]
  $region50: #{tpu_custom_call.1} parent=0
    _
  %s11 = ssub.s32 1, %s9
  %s12 = scalar_select 0, %s11, %s9
  $region1: #{tpu_custom_call.1} parent=0
    #allocation2 [shape = 'u8[131072]{0}', space=vmem, size = 0x20000, scoped, tag = 'input window, operand 2, single buffered']
    #allocation3 [shape = 's32[1]{0}', space=sflag, size = 0x4, scoped, tag = 'scoped memory for tpu_custom_call.1']
    #allocation4 [shape = 's32[1]{0}', space=sflag, size = 0x4, scoped, tag = 'scoped memory for tpu_custom_call.1']
    #allocation5 [shape = 'u8[98304]{0}', space=vmem, size = 0x18000, scoped, tag = 'input window, operand 3, single buffered']
    #allocation6 [shape = 's32[1]{0}', space=sflag, size = 0x4, scoped, tag = 'scoped memory for tpu_custom_call.1']
    #allocation7 [shape = 'u8[4096]{0}', space=vmem, size = 0x1000, scoped, tag = 'output window, operand 0, single buffered']
    %13 = vsyncpa [#allocation3], 0
    %14 = vsyncpa [#allocation6], 0
    %15 = vsyncpa [#allocation4], 0
    // Predicated region
    $region2: #{tpu_custom_call.1} parent=1 // pred_check
      _
    $region3: #{tpu_custom_call.1} parent=1 // pred_check_branch
      %17 = sbr.rel (0) target = $region5
    $region4: #{tpu_custom_call.1} parent=1 // pred_region
      _
    $region5: #{tpu_custom_call.1} parent=1 // pred_fallthru
      _
    // Predicated region
    $region6: #{tpu_custom_call.1} parent=1 // pred_check
      _
    $region7: #{tpu_custom_call.1} parent=1 // pred_check_branch
      %19 = sbr.rel (0) target = $region9
    $region8: #{tpu_custom_call.1} parent=1 // pred_region
      _
    $region9: #{tpu_custom_call.1} parent=1 // pred_fallthru
      _
    // Predicated region
    $region10: #{tpu_custom_call.1} parent=1 // pred_check
      _
    $region11: #{tpu_custom_call.1} parent=1 // pred_check_branch
      %21 = sbr.rel (0) target = $region13
    $region12: #{tpu_custom_call.1} parent=1 // pred_region
      %s23 = ssub.s32 4096, 4096
      %24 = vsyncadd [#allocation3], %s23
      %s25 = sshll.u32 [#allocation2], 4
      %s26 = int_to_ptr.vmem [resolvable:$true] %s25
      %31 = dma.hbm_to_vmem [thread:$0]  %s2, 4096, %s26, [#allocation3], 512, 512, 32
    $region13: #{tpu_custom_call.1} parent=1 // pred_fallthru
      _
    // Predicated region
    $region14: #{tpu_custom_call.1} parent=1 // pred_check
      _
    $region15: #{tpu_custom_call.1} parent=1 // pred_check_branch
      %33 = sbr.rel (0) target = $region17
    $region16: #{tpu_custom_call.1} parent=1 // pred_region
      %s35 = ssub.s32 3072, 3072
      %36 = vsyncadd [#allocation6], %s35
      %s37 = sshll.u32 [#allocation5], 4
      %s38 = int_to_ptr.vmem [resolvable:$true] %s37
      %43 = dma.hbm_to_vmem [thread:$0]  %s3, 3072, %s38, [#allocation6], 384, 384, 24
    $region17: #{tpu_custom_call.1} parent=1 // pred_fallthru
      _
    // Predicated region
    $region18: #{tpu_custom_call.1} parent=1 // pred_check
      _
    $region19: #{tpu_custom_call.1} parent=1 // pred_check_branch
      %45 = sbr.rel (0) target = $region21
    $region20: #{tpu_custom_call.1} parent=1 // pred_region
      _
    $region21: #{tpu_custom_call.1} parent=1 // pred_fallthru
      _
    // Predicated region
    $region22: #{tpu_custom_call.1} parent=1 // pred_check
      _
    $region23: #{tpu_custom_call.1} parent=1 // pred_check_branch
      %47 = sbr.rel (0) target = $region25
    $region24: #{tpu_custom_call.1} parent=1 // pred_region
      _
    $region25: #{tpu_custom_call.1} parent=1 // pred_fallthru
      _
    // Predicated region
    $region26: #{tpu_custom_call.1} parent=1 // pred_check
      _
    $region27: #{tpu_custom_call.1} parent=1 // pred_check_branch
      %49 = sbr.rel (0) target = $region29
    $region28: #{tpu_custom_call.1} parent=1 // pred_region
      _
    $region29: #{tpu_custom_call.1} parent=1 // pred_fallthru
      _
    // Predicated region
    $region30: #{tpu_custom_call.1} parent=1 // pred_check
      _
    $region31: #{tpu_custom_call.1} parent=1 // pred_check_branch
      %51 = sbr.rel (0) target = $region33
    $region32: #{tpu_custom_call.1} parent=1 // pred_region
      _
    $region33: #{tpu_custom_call.1} parent=1 // pred_fallthru
      _
    // Predicated region
    $region34: #{tpu_custom_call.1} parent=1 // pred_check
      _
    $region35: #{tpu_custom_call.1} parent=1 // pred_check_branch
      %53 = sbr.rel (0) target = $region37
    $region36: #{tpu_custom_call.1} parent=1 // pred_region
      %54 = dma.done [#allocation3], 4096
    $region37: #{tpu_custom_call.1} parent=1 // pred_fallthru
      _
    // Predicated region
    $region38: #{tpu_custom_call.1} parent=1 // pred_check
      _
    $region39: #{tpu_custom_call.1} parent=1 // pred_check_branch
      %56 = sbr.rel (0) target = $region41
    $region40: #{tpu_custom_call.1} parent=1 // pred_region
      %57 = dma.done [#allocation6], 3072
    $region41: #{tpu_custom_call.1} parent=1 // pred_fallthru
      _
    %v58 = vld [vmem:[%s0] sm:$0xff]
    %v59 = vld [vmem:[%s1] sm:$0xff]
    %v60 = vld [vmem:[#allocation5] sm:$0xff]
    %v61 = vld [vmem:[#allocation5 + $0x8] sm:$0xff]
    %v62 = vld [vmem:[#allocation5 + $0x10] sm:$0xff]
    %v63 = vld [vmem:[#allocation5 + $0x18] sm:$0xff]
    %v64 = vld [vmem:[#allocation5 + $0x20] sm:$0xff]
    %v65 = vld [vmem:[#allocation5 + $0x28] sm:$0xff]
    %v66 = vld [vmem:[#allocation5 + $0x30] sm:$0xff]
    %v67 = vld [vmem:[#allocation5 + $0x38] sm:$0xff]
    %v68 = vld [vmem:[#allocation5 + $0x40] sm:$0xff]
    %v69 = vld [vmem:[#allocation5 + $0x48] sm:$0xff]
    %v70 = vld [vmem:[#allocation5 + $0x50] sm:$0xff]
    %v71 = vld [vmem:[#allocation5 + $0x58] sm:$0xff]
    %v72 = vld [vmem:[#allocation5 + $0x60] sm:$0xff]
    %v73 = vld [vmem:[#allocation5 + $0x68] sm:$0xff]
    %v74 = vld [vmem:[#allocation5 + $0x70] sm:$0xff]
    %v75 = vld [vmem:[#allocation5 + $0x78] sm:$0xff]
    %v76 = vld [vmem:[#allocation5 + $0x80] sm:$0xff]
    %v77 = vld [vmem:[#allocation5 + $0x88] sm:$0xff]
    %v78 = vld [vmem:[#allocation5 + $0x90] sm:$0xff]
    %v79 = vld [vmem:[#allocation5 + $0x98] sm:$0xff]
    %v80 = vld [vmem:[#allocation5 + $0xa0] sm:$0xff]
    %v81 = vld [vmem:[#allocation5 + $0xa8] sm:$0xff]
    %v82 = vld [vmem:[#allocation5 + $0xb0] sm:$0xff]
    %v83 = vld [vmem:[#allocation5 + $0xb8] sm:$0xff]
    %v84 = vld [vmem:[%s4] sm:$0xf]
    %v85 = vld [vmem:[%s7] sm:$0x1]
    %v86 = vld [vmem:[#allocation2] sm:$0xff]
    %v87 = vld [vmem:[#allocation2 + $0x8] sm:$0xff]
    %v88 = vld [vmem:[#allocation2 + $0x10] sm:$0xff]
    %v89 = vld [vmem:[#allocation2 + $0x18] sm:$0xff]
    %v90 = vld [vmem:[#allocation2 + $0x20] sm:$0xff]
    %v91 = vld [vmem:[#allocation2 + $0x28] sm:$0xff]
    %v92 = vld [vmem:[#allocation2 + $0x30] sm:$0xff]
    %v93 = vld [vmem:[#allocation2 + $0x38] sm:$0xff]
    %v94 = vld [vmem:[#allocation2 + $0x40] sm:$0xff]
    %v95 = vld [vmem:[#allocation2 + $0x48] sm:$0xff]
    %v96 = vld [vmem:[#allocation2 + $0x50] sm:$0xff]
    %v97 = vld [vmem:[#allocation2 + $0x58] sm:$0xff]
    %v98 = vld [vmem:[#allocation2 + $0x60] sm:$0xff]
    %v99 = vld [vmem:[#allocation2 + $0x68] sm:$0xff]
    %v100 = vld [vmem:[#allocation2 + $0x70] sm:$0xff]
    %v101 = vld [vmem:[#allocation2 + $0x78] sm:$0xff]
    %v102 = vld [vmem:[#allocation2 + $0x80] sm:$0xff]
    %v103 = vld [vmem:[#allocation2 + $0x88] sm:$0xff]
    %v104 = vld [vmem:[#allocation2 + $0x90] sm:$0xff]
    %v105 = vld [vmem:[#allocation2 + $0x98] sm:$0xff]
    %v106 = vld [vmem:[#allocation2 + $0xa0] sm:$0xff]
    %v107 = vld [vmem:[#allocation2 + $0xa8] sm:$0xff]
    %v108 = vld [vmem:[#allocation2 + $0xb0] sm:$0xff]
    %v109 = vld [vmem:[#allocation2 + $0xb8] sm:$0xff]
    %v110 = vld [vmem:[#allocation2 + $0xc0] sm:$0xff]
    %v111 = vld [vmem:[#allocation2 + $0xc8] sm:$0xff]
    %v112 = vld [vmem:[#allocation2 + $0xd0] sm:$0xff]
    %v113 = vld [vmem:[#allocation2 + $0xd8] sm:$0xff]
    %v114 = vld [vmem:[#allocation2 + $0xe0] sm:$0xff]
    %v115 = vld [vmem:[#allocation2 + $0xe8] sm:$0xff]
    %v116 = vld [vmem:[#allocation2 + $0xf0] sm:$0xff]
    %v117 = vld [vmem:[#allocation2 + $0xf8] sm:$0xff]
    %vm118 = vcmask 523264
    %v120 = vsel %vm118, %v59, 0
    %122 = vmatprep.subr.mxu0 %v87
    %123 = vmatpush1.msra.mxu0 %v86
    %124 = vmatprep.subr.mxu0 %v91
    %125 = vmatpush1.msra.mxu0 %v90
    %126 = vmatprep.subr.mxu0 %v95
    %127 = vmatpush1.msra.mxu0 %v94
    %128 = vmatprep.subr.mxu0 %v99
    %129 = vmatpush1.msra.mxu0 %v98
    %130 = vmatprep.subr.mxu0 %v103
    %131 = vmatpush1.msra.mxu0 %v102
    %132 = vmatprep.subr.mxu0 %v107
    %133 = vmatpush1.msra.mxu0 %v106
    %134 = vmatprep.subr.mxu0 %v111
    %135 = vmatpush1.msra.mxu0 %v110
    %136 = vmatprep.subr.mxu0 %v115
    %137 = vmatpush1.msra.mxu0 %v114
    %138 = vmatprep.subr.mxu0 0.0
    %139 = vmatpush1.msra.mxu0 0.0
    %140 = vmatprep.subr.mxu0 0.0
    %141 = vmatpush1.msra.mxu0 0.0
    %142 = vmatprep.subr.mxu0 0.0
    %143 = vmatpush1.msra.mxu0 0.0
    %144 = vmatprep.subr.mxu0 0.0
    %145 = vmatpush1.msra.mxu0 0.0
    %146 = vmatprep.subr.mxu0 0.0
    %147 = vmatpush1.msra.mxu0 0.0
    %148 = vmatprep.subr.mxu0 0.0
    %149 = vmatpush1.msra.mxu0 0.0
    %150 = vmatprep.subr.mxu0 0.0
    %151 = vmatpush1.msra.mxu0 0.0
    %152 = vmatprep.subr.mxu0 0.0
    %153 = vmatpush1.msra.mxu0 0.0
    %154 = vmatprep.subr.mxu0 0.0
    %155 = vmatpush1.msra.mxu0 0.0
    %156 = vmatprep.subr.mxu0 0.0
    %157 = vmatpush1.msra.mxu0 0.0
    %158 = vmatprep.subr.mxu0 0.0
    %159 = vmatpush1.msra.mxu0 0.0
    %160 = vmatprep.subr.mxu0 0.0
    %161 = vmatpush1.msra.mxu0 0.0
    %162 = vmatprep.subr.mxu0 0.0
    %163 = vmatpush1.msra.mxu0 0.0
    %164 = vmatprep.subr.mxu0 0.0
    %165 = vmatpush1.msra.mxu0 0.0
    %166 = vmatprep.subr.mxu0 0.0
    %167 = vmatpush1.msra.mxu0 0.0
    %168 = vmatprep.subr.mxu0 0.0
    %169 = vmatpush1.msra.mxu0 0.0
    %170 = vmatprep.subr.mxu0 0.0
    %171 = vmatpush1.msra.mxu0 0.0
    %172 = vmatprep.subr.mxu0 0.0
    %173 = vmatpush1.msra.mxu0 0.0
    %174 = vmatprep.subr.mxu0 0.0
    %175 = vmatpush1.msra.mxu0 0.0
    %176 = vmatprep.subr.mxu0 0.0
    %177 = vmatpush1.msra.mxu0 0.0
    %178 = vmatprep.subr.mxu0 0.0
    %179 = vmatpush1.msra.mxu0 0.0
    %180 = vmatprep.subr.mxu0 0.0
    %181 = vmatpush1.msra.mxu0 0.0
    %182 = vmatprep.subr.mxu0 0.0
    %183 = vmatpush1.msra.mxu0 0.0
    %184 = vmatprep.subr.mxu0 0.0
    %185 = vmatpush1.msra.mxu0 0.0
    %186 = vmatprep.mubr.f32.mxu0 0.0
    %187 = vmatmul.mubr.f32.gmra.mrb[0].mxu0 %v120
    %v188 = vpop.f32.mrb[0].mxu0
    %v189 = vadd.f32 0.0, %v188
    %v190 = vpop.f32.mrb[0].mxu0
    %v191 = vadd.f32 0.0, %v190
    %192 = vdwg.mxu0
    %193 = vmatprep.subr.mxu0 %v89
    %194 = vmatpush1.msra.mxu0 %v88
    %195 = vmatprep.subr.mxu0 %v93
    %196 = vmatpush1.msra.mxu0 %v92
    %197 = vmatprep.subr.mxu0 %v97
    %198 = vmatpush1.msra.mxu0 %v96
    %199 = vmatprep.subr.mxu0 %v101
    %200 = vmatpush1.msra.mxu0 %v100
    %201 = vmatprep.subr.mxu0 %v105
    %202 = vmatpush1.msra.mxu0 %v104
    %203 = vmatprep.subr.mxu0 %v109
    %204 = vmatpush1.msra.mxu0 %v108
    %205 = vmatprep.subr.mxu0 %v113
    %206 = vmatpush1.msra.mxu0 %v112
    %207 = vmatprep.subr.mxu0 %v117
    %208 = vmatpush1.msra.mxu0 %v116
    %209 = vmatprep.subr.mxu0 0.0
    %210 = vmatpush1.msra.mxu0 0.0
    %211 = vmatprep.subr.mxu0 0.0
    %212 = vmatpush1.msra.mxu0 0.0
    %213 = vmatprep.subr.mxu0 0.0
    %214 = vmatpush1.msra.mxu0 0.0
    %215 = vmatprep.subr.mxu0 0.0
    %216 = vmatpush1.msra.mxu0 0.0
    %217 = vmatprep.subr.mxu0 0.0
    %218 = vmatpush1.msra.mxu0 0.0
    %219 = vmatprep.subr.mxu0 0.0
    %220 = vmatpush1.msra.mxu0 0.0
    %221 = vmatprep.subr.mxu0 0.0
    %222 = vmatpush1.msra.mxu0 0.0
    %223 = vmatprep.subr.mxu0 0.0
    %224 = vmatpush1.msra.mxu0 0.0
    %225 = vmatprep.subr.mxu0 0.0
    %226 = vmatpush1.msra.mxu0 0.0
    %227 = vmatprep.subr.mxu0 0.0
    %228 = vmatpush1.msra.mxu0 0.0
    %229 = vmatprep.subr.mxu0 0.0
    %230 = vmatpush1.msra.mxu0 0.0
    %231 = vmatprep.subr.mxu0 0.0
    %232 = vmatpush1.msra.mxu0 0.0
    %233 = vmatprep.subr.mxu0 0.0
    %234 = vmatpush1.msra.mxu0 0.0
    %235 = vmatprep.subr.mxu0 0.0
    %236 = vmatpush1.msra.mxu0 0.0
    %237 = vmatprep.subr.mxu0 0.0
    %238 = vmatpush1.msra.mxu0 0.0
    %239 = vmatprep.subr.mxu0 0.0
    %240 = vmatpush1.msra.mxu0 0.0
    %241 = vmatprep.subr.mxu0 0.0
    %242 = vmatpush1.msra.mxu0 0.0
    %243 = vmatprep.subr.mxu0 0.0
    %244 = vmatpush1.msra.mxu0 0.0
    %245 = vmatprep.subr.mxu0 0.0
    %246 = vmatpush1.msra.mxu0 0.0
    %247 = vmatprep.subr.mxu0 0.0
    %248 = vmatpush1.msra.mxu0 0.0
    %249 = vmatprep.subr.mxu0 0.0
    %250 = vmatpush1.msra.mxu0 0.0
    %251 = vmatprep.subr.mxu0 0.0
    %252 = vmatpush1.msra.mxu0 0.0
    %253 = vmatprep.subr.mxu0 0.0
    %254 = vmatpush1.msra.mxu0 0.0
    %255 = vmatprep.subr.mxu0 0.0
    %256 = vmatpush1.msra.mxu0 0.0
    %257 = vmatprep.mubr.f32.mxu0 0.0
    %258 = vmatmul.mubr.f32.gmra.mrb[0].mxu0 %v120
    %v259 = vpop.f32.mrb[0].mxu0
    %v260 = vadd.f32 0.0, %v259
    %v261 = vpop.f32.mrb[0].mxu0
    %v262 = vadd.f32 0.0, %v261
    %263 = vdwg.mxu0
    %v264 = vld [vmem:[%s5] sm:$0x3]
    %v266 = vlaneseq
    %v267 = vshrl.u32 %v266, 7
    %v268 = vsub.s32 0, %v267
    %v269 = vrot.slane %v264, %v268
    %v270 = vlaneseq
    %v271 = vshrl.u32 %v270, 7
    %v272 = vsub.s32 1, %v271
    %v273 = vrot.slane %v264, %v272
    %v276 = vadd.f32 %v189, %v269
    %v277 = vadd.f32 %v191, %v273
    %v278 = vld [vmem:[%s6] sm:$0x3]
    %v280 = vlaneseq
    %v281 = vshrl.u32 %v280, 7
    %v282 = vsub.s32 0, %v281
    %v283 = vrot.slane %v278, %v282
    %v284 = vlaneseq
    %v285 = vshrl.u32 %v284, 7
    %v286 = vsub.s32 1, %v285
    %v287 = vrot.slane %v278, %v286
    %v290 = vadd.f32 %v189, %v283
    %v291 = vadd.f32 %v191, %v287
    %293 = vset.pattern.permute.xlu0 0
    %294 = vperm.xlu0 %293, %v58
    %v295 = vpop.permute.xlu0 %294
    %v298 = vlaneseq
    %v299 = vshrl.u32 %v298, 7
    %v300 = vsub.s32 0, %v299
    %v301 = vrot.slane %v84, %v300
    %v302 = vlaneseq
    %v303 = vshrl.u32 %v302, 7
    %v304 = vsub.s32 2, %v303
    %v305 = vrot.slane %v84, %v304
    %v308 = vlaneseq
    %v309 = vshrl.u32 %v308, 7
    %v310 = vsub.s32 0, %v309
    %v311 = vrot.slane %v301, %v310
    %v312 = vlaneseq
    %v313 = vshrl.u32 %v312, 7
    %v314 = vsub.s32 0, %v313
    %v315 = vrot.slane %v305, %v314
    %v316 = vmul.f32 %v295, %v311
    %v317 = vmul.f32 %v295, %v315
    %v318 = vadd.f32 %v260, %v316
    %v319 = vadd.f32 %v262, %v317
    %320 = vset.pattern.permute.xlu0 1
    %321 = vperm.xlu0 %320, %v58
    %v322 = vpop.permute.xlu0 %321
    %v324 = vlaneseq
    %v325 = vshrl.u32 %v324, 7
    %v326 = vsub.s32 1, %v325
    %v327 = vrot.slane %v84, %v326
    %v328 = vlaneseq
    %v329 = vshrl.u32 %v328, 7
    %v330 = vsub.s32 3, %v329
    %v331 = vrot.slane %v84, %v330
    %v334 = vlaneseq
    %v335 = vshrl.u32 %v334, 7
    %v336 = vsub.s32 1, %v335
    %v337 = vrot.slane %v327, %v336
    %v338 = vlaneseq
    %v339 = vshrl.u32 %v338, 7
    %v340 = vsub.s32 1, %v339
    %v341 = vrot.slane %v331, %v340
    %v342 = vmul.f32 %v322, %v337
    %v343 = vmul.f32 %v322, %v341
    %v344 = vadd.f32 %v318, %v342
    %v345 = vadd.f32 %v319, %v343
    %v346 = vadd.f32 %v344, %v276
    %v347 = vadd.f32 %v345, %v277
    %v348 = vxor.u32 %v346, 2147483648
    %v349 = vxor.u32 %v347, 2147483648
    %v350 = vmul.f32 %v348, 1.442695
    %v351 = vpow.pop %v350
    %v352 = vmul.f32 %v349, 1.442695
    %v353 = vpow.pop %v352
    %v354 = vadd.f32 %v351, 1.0
    %v355 = vadd.f32 %v353, 1.0
    %v356 = vrcp.pop %v354
    %v357 = vmul.f32 1.0, %v356
    %v358 = vrcp.pop %v355
    %v359 = vmul.f32 1.0, %v358
    %v360 = vtanh.pop %v347
    %361 = vrot.lane.b32.xlu0 %v59, 64
    %v362 = vpop.permute.xlu0 %361
    %v364 = vmul.f32 %v357, %v362
    %366 = vrot.lane.b32.xlu0 %v360, 64
    %v367 = vpop.permute.xlu0 %366
    %v369 = vmul.f32 %v357, %v367
    %371 = vrot.lane.b32.xlu0 %v369, 64
    %v372 = vpop.permute.xlu0 %371
    %v374 = vadd.f32 %v364, %v372
    %v375 = vtanh.pop %v374
    %377 = vrot.lane.b32.xlu0 %v375, 64
    %v378 = vpop.permute.xlu0 %377
    %v380 = vmul.f32 %v359, %v378
    %v382 = vsel %vm118, %v380, 0
    %384 = vmatprep.subr.mxu0 %v61
    %385 = vmatpush1.msra.mxu0 %v60
    %386 = vmatprep.subr.mxu0 %v64
    %387 = vmatpush1.msra.mxu0 %v63
    %388 = vmatprep.subr.mxu0 %v67
    %389 = vmatpush1.msra.mxu0 %v66
    %390 = vmatprep.subr.mxu0 %v70
    %391 = vmatpush1.msra.mxu0 %v69
    %392 = vmatprep.subr.mxu0 %v73
    %393 = vmatpush1.msra.mxu0 %v72
    %394 = vmatprep.subr.mxu0 %v76
    %395 = vmatpush1.msra.mxu0 %v75
    %396 = vmatprep.subr.mxu0 %v79
    %397 = vmatpush1.msra.mxu0 %v78
    %398 = vmatprep.subr.mxu0 %v82
    %399 = vmatpush1.msra.mxu0 %v81
    %400 = vmatprep.subr.mxu0 0.0
    %401 = vmatpush1.msra.mxu0 0.0
    %402 = vmatprep.subr.mxu0 0.0
    %403 = vmatpush1.msra.mxu0 0.0
    %404 = vmatprep.subr.mxu0 0.0
    %405 = vmatpush1.msra.mxu0 0.0
    %406 = vmatprep.subr.mxu0 0.0
    %407 = vmatpush1.msra.mxu0 0.0
    %408 = vmatprep.subr.mxu0 0.0
    %409 = vmatpush1.msra.mxu0 0.0
    %410 = vmatprep.subr.mxu0 0.0
    %411 = vmatpush1.msra.mxu0 0.0
    %412 = vmatprep.subr.mxu0 0.0
    %413 = vmatpush1.msra.mxu0 0.0
    %414 = vmatprep.subr.mxu0 0.0
    %415 = vmatpush1.msra.mxu0 0.0
    %416 = vmatprep.subr.mxu0 0.0
    %417 = vmatpush1.msra.mxu0 0.0
    %418 = vmatprep.subr.mxu0 0.0
    %419 = vmatpush1.msra.mxu0 0.0
    %420 = vmatprep.subr.mxu0 0.0
    %421 = vmatpush1.msra.mxu0 0.0
    %422 = vmatprep.subr.mxu0 0.0
    %423 = vmatpush1.msra.mxu0 0.0
    %424 = vmatprep.subr.mxu0 0.0
    %425 = vmatpush1.msra.mxu0 0.0
    %426 = vmatprep.subr.mxu0 0.0
    %427 = vmatpush1.msra.mxu0 0.0
    %428 = vmatprep.subr.mxu0 0.0
    %429 = vmatpush1.msra.mxu0 0.0
    %430 = vmatprep.subr.mxu0 0.0
    %431 = vmatpush1.msra.mxu0 0.0
    %432 = vmatprep.subr.mxu0 0.0
    %433 = vmatpush1.msra.mxu0 0.0
    %434 = vmatprep.subr.mxu0 0.0
    %435 = vmatpush1.msra.mxu0 0.0
    %436 = vmatprep.subr.mxu0 0.0
    %437 = vmatpush1.msra.mxu0 0.0
    %438 = vmatprep.subr.mxu0 0.0
    %439 = vmatpush1.msra.mxu0 0.0
    %440 = vmatprep.subr.mxu0 0.0
    %441 = vmatpush1.msra.mxu0 0.0
    %442 = vmatprep.subr.mxu0 0.0
    %443 = vmatpush1.msra.mxu0 0.0
    %444 = vmatprep.subr.mxu0 0.0
    %445 = vmatpush1.msra.mxu0 0.0
    %446 = vmatprep.subr.mxu0 0.0
    %447 = vmatpush1.msra.mxu0 0.0
    %448 = vmatprep.mubr.f32.mxu0 0.0
    %449 = vmatmul.mubr.f32.gmra.mrb[0].mxu0 %v382
    %v450 = vpop.f32.mrb[0].mxu0
    %v451 = vadd.f32 0.0, %v450
    %v452 = vpop.f32.mrb[0].mxu0
    %v453 = vadd.f32 0.0, %v452
    %454 = vdwg.mxu0
    %455 = vmatprep.subr.mxu0 0.0
    %456 = vmatpush1.msra.mxu0 %v62
    %457 = vmatprep.subr.mxu0 0.0
    %458 = vmatpush1.msra.mxu0 %v65
    %459 = vmatprep.subr.mxu0 0.0
    %460 = vmatpush1.msra.mxu0 %v68
    %461 = vmatprep.subr.mxu0 0.0
    %462 = vmatpush1.msra.mxu0 %v71
    %463 = vmatprep.subr.mxu0 0.0
    %464 = vmatpush1.msra.mxu0 %v74
    %465 = vmatprep.subr.mxu0 0.0
    %466 = vmatpush1.msra.mxu0 %v77
    %467 = vmatprep.subr.mxu0 0.0
    %468 = vmatpush1.msra.mxu0 %v80
    %469 = vmatprep.subr.mxu0 0.0
    %470 = vmatpush1.msra.mxu0 %v83
    %471 = vmatprep.subr.mxu0 0.0
    %472 = vmatpush1.msra.mxu0 0.0
    %473 = vmatprep.subr.mxu0 0.0
    %474 = vmatpush1.msra.mxu0 0.0
    %475 = vmatprep.subr.mxu0 0.0
    %476 = vmatpush1.msra.mxu0 0.0
    %477 = vmatprep.subr.mxu0 0.0
    %478 = vmatpush1.msra.mxu0 0.0
    %479 = vmatprep.subr.mxu0 0.0
    %480 = vmatpush1.msra.mxu0 0.0
    %481 = vmatprep.subr.mxu0 0.0
    %482 = vmatpush1.msra.mxu0 0.0
    %483 = vmatprep.subr.mxu0 0.0
    %484 = vmatpush1.msra.mxu0 0.0
    %485 = vmatprep.subr.mxu0 0.0
    %486 = vmatpush1.msra.mxu0 0.0
    %487 = vmatprep.subr.mxu0 0.0
    %488 = vmatpush1.msra.mxu0 0.0
    %489 = vmatprep.subr.mxu0 0.0
    %490 = vmatpush1.msra.mxu0 0.0
    %491 = vmatprep.subr.mxu0 0.0
    %492 = vmatpush1.msra.mxu0 0.0
    %493 = vmatprep.subr.mxu0 0.0
    %494 = vmatpush1.msra.mxu0 0.0
    %495 = vmatprep.subr.mxu0 0.0
    %496 = vmatpush1.msra.mxu0 0.0
    %497 = vmatprep.subr.mxu0 0.0
    %498 = vmatpush1.msra.mxu0 0.0
    %499 = vmatprep.subr.mxu0 0.0
    %500 = vmatpush1.msra.mxu0 0.0
    %501 = vmatprep.subr.mxu0 0.0
    %502 = vmatpush1.msra.mxu0 0.0
    %503 = vmatprep.subr.mxu0 0.0
    %504 = vmatpush1.msra.mxu0 0.0
    %505 = vmatprep.subr.mxu0 0.0
    %506 = vmatpush1.msra.mxu0 0.0
    %507 = vmatprep.subr.mxu0 0.0
    %508 = vmatpush1.msra.mxu0 0.0
    %509 = vmatprep.subr.mxu0 0.0
    %510 = vmatpush1.msra.mxu0 0.0
    %511 = vmatprep.subr.mxu0 0.0
    %512 = vmatpush1.msra.mxu0 0.0
    %513 = vmatprep.subr.mxu0 0.0
    %514 = vmatpush1.msra.mxu0 0.0
    %515 = vmatprep.subr.mxu0 0.0
    %516 = vmatpush1.msra.mxu0 0.0
    %517 = vmatprep.subr.mxu0 0.0
    %518 = vmatpush1.msra.mxu0 0.0
    %519 = vmatprep.mubr.f32.mxu0 0.0
    %520 = vmatmul.mubr.f32.gmra.mrb[0].mxu0 %v382
    %v521 = vpop.f32.mrb[0].mxu0
    %v522 = vadd.f32 0.0, %v521
    %v523 = vpop.f32.mrb[0].mxu0
    %524 = vdwg.mxu0
    %v526 = vlaneseq
    %v527 = vshrl.u32 %v526, 7
    %v528 = vsub.s32 0, %v527
    %v529 = vrot.slane %v85, %v528
    %v531 = vadd.f32 %v522, %v529
    %v532 = vadd.f32 %v451, %v316
    %v533 = vadd.f32 %v453, %v317
    %v534 = vadd.f32 %v532, %v342
    %v535 = vadd.f32 %v533, %v343
    %v536 = vadd.f32 %v534, %v290
    %v537 = vadd.f32 %v535, %v291
    %v538 = vadd.f32 %v58, %v531
    %v539 = vxor.u32 %v536, 2147483648
    %v540 = vxor.u32 %v537, 2147483648
    %v541 = vmul.f32 %v539, 1.442695
    %v542 = vpow.pop %v541
    %v543 = vmul.f32 %v540, 1.442695
    %v544 = vpow.pop %v543
    %v545 = vadd.f32 %v542, 1.0
    %v546 = vadd.f32 %v544, 1.0
    %v547 = vrcp.pop %v545
    %v548 = vmul.f32 1.0, %v547
    %v549 = vrcp.pop %v546
    %v550 = vmul.f32 1.0, %v549
    %v551 = vtanh.pop %v537
    %v552 = vmul.f32 %v548, %v374
    %554 = vrot.lane.b32.xlu0 %v551, 64
    %v555 = vpop.permute.xlu0 %554
    %v557 = vmul.f32 %v548, %v555
    %559 = vrot.lane.b32.xlu0 %v557, 64
    %v560 = vpop.permute.xlu0 %559
    %v562 = vadd.f32 %v552, %v560
    %v563 = vtanh.pop %v562
    %565 = vrot.lane.b32.xlu0 %v563, 64
    %v566 = vpop.permute.xlu0 %565
    %v568 = vmul.f32 %v550, %v566
    %v570 = vsel %vm118, %v568, 0
    %572 = vmatprep.subr.mxu0 %v61
    %573 = vmatpush1.msra.mxu0 %v60
    %574 = vmatprep.subr.mxu0 %v64
    %575 = vmatpush1.msra.mxu0 %v63
    %576 = vmatprep.subr.mxu0 %v67
    %577 = vmatpush1.msra.mxu0 %v66
    %578 = vmatprep.subr.mxu0 %v70
    %579 = vmatpush1.msra.mxu0 %v69
    %580 = vmatprep.subr.mxu0 %v73
    %581 = vmatpush1.msra.mxu0 %v72
    %582 = vmatprep.subr.mxu0 %v76
    %583 = vmatpush1.msra.mxu0 %v75
    %584 = vmatprep.subr.mxu0 %v79
    %585 = vmatpush1.msra.mxu0 %v78
    %586 = vmatprep.subr.mxu0 %v82
    %587 = vmatpush1.msra.mxu0 %v81
    %588 = vmatprep.subr.mxu0 0.0
    %589 = vmatpush1.msra.mxu0 0.0
    %590 = vmatprep.subr.mxu0 0.0
    %591 = vmatpush1.msra.mxu0 0.0
    %592 = vmatprep.subr.mxu0 0.0
    %593 = vmatpush1.msra.mxu0 0.0
    %594 = vmatprep.subr.mxu0 0.0
    %595 = vmatpush1.msra.mxu0 0.0
    %596 = vmatprep.subr.mxu0 0.0
    %597 = vmatpush1.msra.mxu0 0.0
    %598 = vmatprep.subr.mxu0 0.0
    %599 = vmatpush1.msra.mxu0 0.0
    %600 = vmatprep.subr.mxu0 0.0
    %601 = vmatpush1.msra.mxu0 0.0
    %602 = vmatprep.subr.mxu0 0.0
    %603 = vmatpush1.msra.mxu0 0.0
    %604 = vmatprep.subr.mxu0 0.0
    %605 = vmatpush1.msra.mxu0 0.0
    %606 = vmatprep.subr.mxu0 0.0
    %607 = vmatpush1.msra.mxu0 0.0
    %608 = vmatprep.subr.mxu0 0.0
    %609 = vmatpush1.msra.mxu0 0.0
    %610 = vmatprep.subr.mxu0 0.0
    %611 = vmatpush1.msra.mxu0 0.0
    %612 = vmatprep.subr.mxu0 0.0
    %613 = vmatpush1.msra.mxu0 0.0
    %614 = vmatprep.subr.mxu0 0.0
    %615 = vmatpush1.msra.mxu0 0.0
    %616 = vmatprep.subr.mxu0 0.0
    %617 = vmatpush1.msra.mxu0 0.0
    %618 = vmatprep.subr.mxu0 0.0
    %619 = vmatpush1.msra.mxu0 0.0
    %620 = vmatprep.subr.mxu0 0.0
    %621 = vmatpush1.msra.mxu0 0.0
    %622 = vmatprep.subr.mxu0 0.0
    %623 = vmatpush1.msra.mxu0 0.0
    %624 = vmatprep.subr.mxu0 0.0
    %625 = vmatpush1.msra.mxu0 0.0
    %626 = vmatprep.subr.mxu0 0.0
    %627 = vmatpush1.msra.mxu0 0.0
    %628 = vmatprep.subr.mxu0 0.0
    %629 = vmatpush1.msra.mxu0 0.0
    %630 = vmatprep.subr.mxu0 0.0
    %631 = vmatpush1.msra.mxu0 0.0
    %632 = vmatprep.subr.mxu0 0.0
    %633 = vmatpush1.msra.mxu0 0.0
    %634 = vmatprep.subr.mxu0 0.0
    %635 = vmatpush1.msra.mxu0 0.0
    %636 = vmatprep.mubr.f32.mxu0 0.0
    %637 = vmatmul.mubr.f32.gmra.mrb[0].mxu0 %v570
    %v638 = vpop.f32.mrb[0].mxu0
    %v639 = vadd.f32 0.0, %v638
    %v640 = vpop.f32.mrb[0].mxu0
    %v641 = vadd.f32 0.0, %v640
    %642 = vdwg.mxu0
    %643 = vmatprep.subr.mxu0 0.0
    %644 = vmatpush1.msra.mxu0 %v62
    %645 = vmatprep.subr.mxu0 0.0
    %646 = vmatpush1.msra.mxu0 %v65
    %647 = vmatprep.subr.mxu0 0.0
    %648 = vmatpush1.msra.mxu0 %v68
    %649 = vmatprep.subr.mxu0 0.0
    %650 = vmatpush1.msra.mxu0 %v71
    %651 = vmatprep.subr.mxu0 0.0
    %652 = vmatpush1.msra.mxu0 %v74
    %653 = vmatprep.subr.mxu0 0.0
    %654 = vmatpush1.msra.mxu0 %v77
    %655 = vmatprep.subr.mxu0 0.0
    %656 = vmatpush1.msra.mxu0 %v80
    %657 = vmatprep.subr.mxu0 0.0
    %658 = vmatpush1.msra.mxu0 %v83
    %659 = vmatprep.subr.mxu0 0.0
    %660 = vmatpush1.msra.mxu0 0.0
    %661 = vmatprep.subr.mxu0 0.0
    %662 = vmatpush1.msra.mxu0 0.0
    %663 = vmatprep.subr.mxu0 0.0
    %664 = vmatpush1.msra.mxu0 0.0
    %665 = vmatprep.subr.mxu0 0.0
    %666 = vmatpush1.msra.mxu0 0.0
    %667 = vmatprep.subr.mxu0 0.0
    %668 = vmatpush1.msra.mxu0 0.0
    %669 = vmatprep.subr.mxu0 0.0
    %670 = vmatpush1.msra.mxu0 0.0
    %671 = vmatprep.subr.mxu0 0.0
    %672 = vmatpush1.msra.mxu0 0.0
    %673 = vmatprep.subr.mxu0 0.0
    %674 = vmatpush1.msra.mxu0 0.0
    %675 = vmatprep.subr.mxu0 0.0
    %676 = vmatpush1.msra.mxu0 0.0
    %677 = vmatprep.subr.mxu0 0.0
    %678 = vmatpush1.msra.mxu0 0.0
    %679 = vmatprep.subr.mxu0 0.0
    %680 = vmatpush1.msra.mxu0 0.0
    %681 = vmatprep.subr.mxu0 0.0
    %682 = vmatpush1.msra.mxu0 0.0
    %683 = vmatprep.subr.mxu0 0.0
    %684 = vmatpush1.msra.mxu0 0.0
    %685 = vmatprep.subr.mxu0 0.0
    %686 = vmatpush1.msra.mxu0 0.0
    %687 = vmatprep.subr.mxu0 0.0
    %688 = vmatpush1.msra.mxu0 0.0
    %689 = vmatprep.subr.mxu0 0.0
    %690 = vmatpush1.msra.mxu0 0.0
    %691 = vmatprep.subr.mxu0 0.0
    %692 = vmatpush1.msra.mxu0 0.0
    %693 = vmatprep.subr.mxu0 0.0
    %694 = vmatpush1.msra.mxu0 0.0
    %695 = vmatprep.subr.mxu0 0.0
    %696 = vmatpush1.msra.mxu0 0.0
    %697 = vmatprep.subr.mxu0 0.0
    %698 = vmatpush1.msra.mxu0 0.0
    %699 = vmatprep.subr.mxu0 0.0
    %700 = vmatpush1.msra.mxu0 0.0
    %701 = vmatprep.subr.mxu0 0.0
    %702 = vmatpush1.msra.mxu0 0.0
    %703 = vmatprep.subr.mxu0 0.0
    %704 = vmatpush1.msra.mxu0 0.0
    %705 = vmatprep.subr.mxu0 0.0
    %706 = vmatpush1.msra.mxu0 0.0
    %707 = vmatprep.mubr.f32.mxu0 0.0
    %708 = vmatmul.mubr.f32.gmra.mrb[0].mxu0 %v570
    %v709 = vpop.f32.mrb[0].mxu0
    %v710 = vadd.f32 0.0, %v709
    %v711 = vpop.f32.mrb[0].mxu0
    %712 = vdwg.mxu0
    %v713 = vadd.f32 %v710, %v529
    %715 = vset.pattern.permute.xlu0 0
    %716 = vperm.xlu0 %715, %v538
    %v717 = vpop.permute.xlu0 %716
    %v719 = vmul.f32 %v717, %v311
    %v720 = vmul.f32 %v717, %v315
    %v721 = vadd.f32 %v639, %v719
    %v722 = vadd.f32 %v641, %v720
    %723 = vset.pattern.permute.xlu0 1
    %724 = vperm.xlu0 %723, %v538
    %v725 = vpop.permute.xlu0 %724
    %v727 = vmul.f32 %v725, %v337
    %v728 = vmul.f32 %v725, %v341
    %v729 = vadd.f32 %v721, %v727
    %v730 = vadd.f32 %v722, %v728
    %v731 = vadd.f32 %v729, %v290
    %v732 = vadd.f32 %v730, %v291
    %v733 = vadd.f32 %v538, %v713
    %v734 = vxor.u32 %v731, 2147483648
    %v735 = vxor.u32 %v732, 2147483648
    %v736 = vmul.f32 %v734, 1.442695
    %v737 = vpow.pop %v736
    %v738 = vmul.f32 %v735, 1.442695
    %v739 = vpow.pop %v738
    %v740 = vadd.f32 %v737, 1.0
    %v741 = vadd.f32 %v739, 1.0
    %v742 = vrcp.pop %v740
    %v743 = vmul.f32 1.0, %v742
    %v744 = vrcp.pop %v741
    %v745 = vmul.f32 1.0, %v744
    %v746 = vtanh.pop %v732
    %v747 = vmul.f32 %v743, %v562
    %749 = vrot.lane.b32.xlu0 %v746, 64
    %v750 = vpop.permute.xlu0 %749
    %v752 = vmul.f32 %v743, %v750
    %754 = vrot.lane.b32.xlu0 %v752, 64
    %v755 = vpop.permute.xlu0 %754
    %v757 = vadd.f32 %v747, %v755
    %v758 = vtanh.pop %v757
    %760 = vrot.lane.b32.xlu0 %v758, 64
    %v761 = vpop.permute.xlu0 %760
    %v763 = vmul.f32 %v745, %v761
    %v765 = vsel %vm118, %v763, 0
    %767 = vmatprep.subr.mxu0 %v61
    %768 = vmatpush1.msra.mxu0 %v60
    %769 = vmatprep.subr.mxu0 %v64
    %770 = vmatpush1.msra.mxu0 %v63
    %771 = vmatprep.subr.mxu0 %v67
    %772 = vmatpush1.msra.mxu0 %v66
    %773 = vmatprep.subr.mxu0 %v70
    %774 = vmatpush1.msra.mxu0 %v69
    %775 = vmatprep.subr.mxu0 %v73
    %776 = vmatpush1.msra.mxu0 %v72
    %777 = vmatprep.subr.mxu0 %v76
    %778 = vmatpush1.msra.mxu0 %v75
    %779 = vmatprep.subr.mxu0 %v79
    %780 = vmatpush1.msra.mxu0 %v78
    %781 = vmatprep.subr.mxu0 %v82
    %782 = vmatpush1.msra.mxu0 %v81
    %783 = vmatprep.subr.mxu0 0.0
    %784 = vmatpush1.msra.mxu0 0.0
    %785 = vmatprep.subr.mxu0 0.0
    %786 = vmatpush1.msra.mxu0 0.0
    %787 = vmatprep.subr.mxu0 0.0
    %788 = vmatpush1.msra.mxu0 0.0
    %789 = vmatprep.subr.mxu0 0.0
    %790 = vmatpush1.msra.mxu0 0.0
    %791 = vmatprep.subr.mxu0 0.0
    %792 = vmatpush1.msra.mxu0 0.0
    %793 = vmatprep.subr.mxu0 0.0
    %794 = vmatpush1.msra.mxu0 0.0
    %795 = vmatprep.subr.mxu0 0.0
    %796 = vmatpush1.msra.mxu0 0.0
    %797 = vmatprep.subr.mxu0 0.0
    %798 = vmatpush1.msra.mxu0 0.0
    %799 = vmatprep.subr.mxu0 0.0
    %800 = vmatpush1.msra.mxu0 0.0
    %801 = vmatprep.subr.mxu0 0.0
    %802 = vmatpush1.msra.mxu0 0.0
    %803 = vmatprep.subr.mxu0 0.0
    %804 = vmatpush1.msra.mxu0 0.0
    %805 = vmatprep.subr.mxu0 0.0
    %806 = vmatpush1.msra.mxu0 0.0
    %807 = vmatprep.subr.mxu0 0.0
    %808 = vmatpush1.msra.mxu0 0.0
    %809 = vmatprep.subr.mxu0 0.0
    %810 = vmatpush1.msra.mxu0 0.0
    %811 = vmatprep.subr.mxu0 0.0
    %812 = vmatpush1.msra.mxu0 0.0
    %813 = vmatprep.subr.mxu0 0.0
    %814 = vmatpush1.msra.mxu0 0.0
    %815 = vmatprep.subr.mxu0 0.0
    %816 = vmatpush1.msra.mxu0 0.0
    %817 = vmatprep.subr.mxu0 0.0
    %818 = vmatpush1.msra.mxu0 0.0
    %819 = vmatprep.subr.mxu0 0.0
    %820 = vmatpush1.msra.mxu0 0.0
    %821 = vmatprep.subr.mxu0 0.0
    %822 = vmatpush1.msra.mxu0 0.0
    %823 = vmatprep.subr.mxu0 0.0
    %824 = vmatpush1.msra.mxu0 0.0
    %825 = vmatprep.subr.mxu0 0.0
    %826 = vmatpush1.msra.mxu0 0.0
    %827 = vmatprep.subr.mxu0 0.0
    %828 = vmatpush1.msra.mxu0 0.0
    %829 = vmatprep.subr.mxu0 0.0
    %830 = vmatpush1.msra.mxu0 0.0
    %831 = vmatprep.mubr.f32.mxu0 0.0
    %832 = vmatmul.mubr.f32.gmra.mrb[0].mxu0 %v765
    %v833 = vpop.f32.mrb[0].mxu0
    %v834 = vadd.f32 0.0, %v833
    %v835 = vpop.f32.mrb[0].mxu0
    %v836 = vadd.f32 0.0, %v835
    %837 = vdwg.mxu0
    %838 = vmatprep.subr.mxu0 0.0
    %839 = vmatpush1.msra.mxu0 %v62
    %840 = vmatprep.subr.mxu0 0.0
    %841 = vmatpush1.msra.mxu0 %v65
    %842 = vmatprep.subr.mxu0 0.0
    %843 = vmatpush1.msra.mxu0 %v68
    %844 = vmatprep.subr.mxu0 0.0
    %845 = vmatpush1.msra.mxu0 %v71
    %846 = vmatprep.subr.mxu0 0.0
    %847 = vmatpush1.msra.mxu0 %v74
    %848 = vmatprep.subr.mxu0 0.0
    %849 = vmatpush1.msra.mxu0 %v77
    %850 = vmatprep.subr.mxu0 0.0
    %851 = vmatpush1.msra.mxu0 %v80
    %852 = vmatprep.subr.mxu0 0.0
    %853 = vmatpush1.msra.mxu0 %v83
    %854 = vmatprep.subr.mxu0 0.0
    %855 = vmatpush1.msra.mxu0 0.0
    %856 = vmatprep.subr.mxu0 0.0
    %857 = vmatpush1.msra.mxu0 0.0
    %858 = vmatprep.subr.mxu0 0.0
    %859 = vmatpush1.msra.mxu0 0.0
    %860 = vmatprep.subr.mxu0 0.0
    %861 = vmatpush1.msra.mxu0 0.0
    %862 = vmatprep.subr.mxu0 0.0
    %863 = vmatpush1.msra.mxu0 0.0
    %864 = vmatprep.subr.mxu0 0.0
    %865 = vmatpush1.msra.mxu0 0.0
    %866 = vmatprep.subr.mxu0 0.0
    %867 = vmatpush1.msra.mxu0 0.0
    %868 = vmatprep.subr.mxu0 0.0
    %869 = vmatpush1.msra.mxu0 0.0
    %870 = vmatprep.subr.mxu0 0.0
    %871 = vmatpush1.msra.mxu0 0.0
    %872 = vmatprep.subr.mxu0 0.0
    %873 = vmatpush1.msra.mxu0 0.0
    %874 = vmatprep.subr.mxu0 0.0
    %875 = vmatpush1.msra.mxu0 0.0
    %876 = vmatprep.subr.mxu0 0.0
    %877 = vmatpush1.msra.mxu0 0.0
    %878 = vmatprep.subr.mxu0 0.0
    %879 = vmatpush1.msra.mxu0 0.0
    %880 = vmatprep.subr.mxu0 0.0
    %881 = vmatpush1.msra.mxu0 0.0
    %882 = vmatprep.subr.mxu0 0.0
    %883 = vmatpush1.msra.mxu0 0.0
    %884 = vmatprep.subr.mxu0 0.0
    %885 = vmatpush1.msra.mxu0 0.0
    %886 = vmatprep.subr.mxu0 0.0
    %887 = vmatpush1.msra.mxu0 0.0
    %888 = vmatprep.subr.mxu0 0.0
    %889 = vmatpush1.msra.mxu0 0.0
    %890 = vmatprep.subr.mxu0 0.0
    %891 = vmatpush1.msra.mxu0 0.0
    %892 = vmatprep.subr.mxu0 0.0
    %893 = vmatpush1.msra.mxu0 0.0
    %894 = vmatprep.subr.mxu0 0.0
    %895 = vmatpush1.msra.mxu0 0.0
    %896 = vmatprep.subr.mxu0 0.0
    %897 = vmatpush1.msra.mxu0 0.0
    %898 = vmatprep.subr.mxu0 0.0
    %899 = vmatpush1.msra.mxu0 0.0
    %900 = vmatprep.subr.mxu0 0.0
    %901 = vmatpush1.msra.mxu0 0.0
    %902 = vmatprep.mubr.f32.mxu0 0.0
    %903 = vmatmul.mubr.f32.gmra.mrb[0].mxu0 %v765
    %v904 = vpop.f32.mrb[0].mxu0
    %v905 = vadd.f32 0.0, %v904
    %v906 = vpop.f32.mrb[0].mxu0
    %907 = vdwg.mxu0
    %v908 = vadd.f32 %v905, %v529
    %910 = vset.pattern.permute.xlu0 0
    %911 = vperm.xlu0 %910, %v733
    %v912 = vpop.permute.xlu0 %911
    %v914 = vmul.f32 %v912, %v311
    %v915 = vmul.f32 %v912, %v315
    %v916 = vadd.f32 %v834, %v914
    %v917 = vadd.f32 %v836, %v915
    %918 = vset.pattern.permute.xlu0 1
    %919 = vperm.xlu0 %918, %v733
    %v920 = vpop.permute.xlu0 %919
    %v922 = vmul.f32 %v920, %v337
    %v923 = vmul.f32 %v920, %v341
    %v924 = vadd.f32 %v916, %v922
    %v925 = vadd.f32 %v917, %v923
    %v926 = vadd.f32 %v924, %v290
    %v927 = vadd.f32 %v925, %v291
    %v928 = vadd.f32 %v733, %v908
    %v929 = vxor.u32 %v926, 2147483648
    %v930 = vxor.u32 %v927, 2147483648
    %v931 = vmul.f32 %v929, 1.442695
    %v932 = vpow.pop %v931
    %v933 = vmul.f32 %v930, 1.442695
    %v934 = vpow.pop %v933
    %v935 = vadd.f32 %v932, 1.0
    %v936 = vadd.f32 %v934, 1.0
    %v937 = vrcp.pop %v935
    %v938 = vmul.f32 1.0, %v937
    %v939 = vrcp.pop %v936
    %v940 = vmul.f32 1.0, %v939
    %v941 = vtanh.pop %v927
    %v942 = vmul.f32 %v938, %v757
    %944 = vrot.lane.b32.xlu0 %v941, 64
    %v945 = vpop.permute.xlu0 %944
    %v947 = vmul.f32 %v938, %v945
    %949 = vrot.lane.b32.xlu0 %v947, 64
    %v950 = vpop.permute.xlu0 %949
    %v952 = vadd.f32 %v942, %v950
    %v953 = vtanh.pop %v952
    %955 = vrot.lane.b32.xlu0 %v953, 64
    %v956 = vpop.permute.xlu0 %955
    %v958 = vmul.f32 %v940, %v956
    %v960 = vsel %vm118, %v958, 0
    %962 = vmatprep.subr.mxu0 %v61
    %963 = vmatpush1.msra.mxu0 %v60
    %964 = vmatprep.subr.mxu0 %v64
    %965 = vmatpush1.msra.mxu0 %v63
    %966 = vmatprep.subr.mxu0 %v67
    %967 = vmatpush1.msra.mxu0 %v66
    %968 = vmatprep.subr.mxu0 %v70
    %969 = vmatpush1.msra.mxu0 %v69
    %970 = vmatprep.subr.mxu0 %v73
    %971 = vmatpush1.msra.mxu0 %v72
    %972 = vmatprep.subr.mxu0 %v76
    %973 = vmatpush1.msra.mxu0 %v75
    %974 = vmatprep.subr.mxu0 %v79
    %975 = vmatpush1.msra.mxu0 %v78
    %976 = vmatprep.subr.mxu0 %v82
    %977 = vmatpush1.msra.mxu0 %v81
    %978 = vmatprep.subr.mxu0 0.0
    %979 = vmatpush1.msra.mxu0 0.0
    %980 = vmatprep.subr.mxu0 0.0
    %981 = vmatpush1.msra.mxu0 0.0
    %982 = vmatprep.subr.mxu0 0.0
    %983 = vmatpush1.msra.mxu0 0.0
    %984 = vmatprep.subr.mxu0 0.0
    %985 = vmatpush1.msra.mxu0 0.0
    %986 = vmatprep.subr.mxu0 0.0
    %987 = vmatpush1.msra.mxu0 0.0
    %988 = vmatprep.subr.mxu0 0.0
    %989 = vmatpush1.msra.mxu0 0.0
    %990 = vmatprep.subr.mxu0 0.0
    %991 = vmatpush1.msra.mxu0 0.0
    %992 = vmatprep.subr.mxu0 0.0
    %993 = vmatpush1.msra.mxu0 0.0
    %994 = vmatprep.subr.mxu0 0.0
    %995 = vmatpush1.msra.mxu0 0.0
    %996 = vmatprep.subr.mxu0 0.0
    %997 = vmatpush1.msra.mxu0 0.0
    %998 = vmatprep.subr.mxu0 0.0
    %999 = vmatpush1.msra.mxu0 0.0
    %1000 = vmatprep.subr.mxu0 0.0
    %1001 = vmatpush1.msra.mxu0 0.0
    %1002 = vmatprep.subr.mxu0 0.0
    %1003 = vmatpush1.msra.mxu0 0.0
    %1004 = vmatprep.subr.mxu0 0.0
    %1005 = vmatpush1.msra.mxu0 0.0
    %1006 = vmatprep.subr.mxu0 0.0
    %1007 = vmatpush1.msra.mxu0 0.0
    %1008 = vmatprep.subr.mxu0 0.0
    %1009 = vmatpush1.msra.mxu0 0.0
    %1010 = vmatprep.subr.mxu0 0.0
    %1011 = vmatpush1.msra.mxu0 0.0
    %1012 = vmatprep.subr.mxu0 0.0
    %1013 = vmatpush1.msra.mxu0 0.0
    %1014 = vmatprep.subr.mxu0 0.0
    %1015 = vmatpush1.msra.mxu0 0.0
    %1016 = vmatprep.subr.mxu0 0.0
    %1017 = vmatpush1.msra.mxu0 0.0
    %1018 = vmatprep.subr.mxu0 0.0
    %1019 = vmatpush1.msra.mxu0 0.0
    %1020 = vmatprep.subr.mxu0 0.0
    %1021 = vmatpush1.msra.mxu0 0.0
    %1022 = vmatprep.subr.mxu0 0.0
    %1023 = vmatpush1.msra.mxu0 0.0
    %1024 = vmatprep.subr.mxu0 0.0
    %1025 = vmatpush1.msra.mxu0 0.0
    %1026 = vmatprep.mubr.f32.mxu0 0.0
    %1027 = vmatmul.mubr.f32.gmra.mrb[0].mxu0 %v960
    %v1028 = vpop.f32.mrb[0].mxu0
    %v1029 = vadd.f32 0.0, %v1028
    %v1030 = vpop.f32.mrb[0].mxu0
    %v1031 = vadd.f32 0.0, %v1030
    %1032 = vdwg.mxu0
    %1033 = vmatprep.subr.mxu0 0.0
    %1034 = vmatpush1.msra.mxu0 %v62
    %1035 = vmatprep.subr.mxu0 0.0
    %1036 = vmatpush1.msra.mxu0 %v65
    %1037 = vmatprep.subr.mxu0 0.0
    %1038 = vmatpush1.msra.mxu0 %v68
    %1039 = vmatprep.subr.mxu0 0.0
    %1040 = vmatpush1.msra.mxu0 %v71
    %1041 = vmatprep.subr.mxu0 0.0
    %1042 = vmatpush1.msra.mxu0 %v74
    %1043 = vmatprep.subr.mxu0 0.0
    %1044 = vmatpush1.msra.mxu0 %v77
    %1045 = vmatprep.subr.mxu0 0.0
    %1046 = vmatpush1.msra.mxu0 %v80
    %1047 = vmatprep.subr.mxu0 0.0
    %1048 = vmatpush1.msra.mxu0 %v83
    %1049 = vmatprep.subr.mxu0 0.0
    %1050 = vmatpush1.msra.mxu0 0.0
    %1051 = vmatprep.subr.mxu0 0.0
    %1052 = vmatpush1.msra.mxu0 0.0
    %1053 = vmatprep.subr.mxu0 0.0
    %1054 = vmatpush1.msra.mxu0 0.0
    %1055 = vmatprep.subr.mxu0 0.0
    %1056 = vmatpush1.msra.mxu0 0.0
    %1057 = vmatprep.subr.mxu0 0.0
    %1058 = vmatpush1.msra.mxu0 0.0
    %1059 = vmatprep.subr.mxu0 0.0
    %1060 = vmatpush1.msra.mxu0 0.0
    %1061 = vmatprep.subr.mxu0 0.0
    %1062 = vmatpush1.msra.mxu0 0.0
    %1063 = vmatprep.subr.mxu0 0.0
    %1064 = vmatpush1.msra.mxu0 0.0
    %1065 = vmatprep.subr.mxu0 0.0
    %1066 = vmatpush1.msra.mxu0 0.0
    %1067 = vmatprep.subr.mxu0 0.0
    %1068 = vmatpush1.msra.mxu0 0.0
    %1069 = vmatprep.subr.mxu0 0.0
    %1070 = vmatpush1.msra.mxu0 0.0
    %1071 = vmatprep.subr.mxu0 0.0
    %1072 = vmatpush1.msra.mxu0 0.0
    %1073 = vmatprep.subr.mxu0 0.0
    %1074 = vmatpush1.msra.mxu0 0.0
    %1075 = vmatprep.subr.mxu0 0.0
    %1076 = vmatpush1.msra.mxu0 0.0
    %1077 = vmatprep.subr.mxu0 0.0
    %1078 = vmatpush1.msra.mxu0 0.0
    %1079 = vmatprep.subr.mxu0 0.0
    %1080 = vmatpush1.msra.mxu0 0.0
    %1081 = vmatprep.subr.mxu0 0.0
    %1082 = vmatpush1.msra.mxu0 0.0
    %1083 = vmatprep.subr.mxu0 0.0
    %1084 = vmatpush1.msra.mxu0 0.0
    %1085 = vmatprep.subr.mxu0 0.0
    %1086 = vmatpush1.msra.mxu0 0.0
    %1087 = vmatprep.subr.mxu0 0.0
    %1088 = vmatpush1.msra.mxu0 0.0
    %1089 = vmatprep.subr.mxu0 0.0
    %1090 = vmatpush1.msra.mxu0 0.0
    %1091 = vmatprep.subr.mxu0 0.0
    %1092 = vmatpush1.msra.mxu0 0.0
    %1093 = vmatprep.subr.mxu0 0.0
    %1094 = vmatpush1.msra.mxu0 0.0
    %1095 = vmatprep.subr.mxu0 0.0
    %1096 = vmatpush1.msra.mxu0 0.0
    %1097 = vmatprep.mubr.f32.mxu0 0.0
    %1098 = vmatmul.mubr.f32.gmra.mrb[0].mxu0 %v960
    %v1099 = vpop.f32.mrb[0].mxu0
    %v1100 = vadd.f32 0.0, %v1099
    %v1101 = vpop.f32.mrb[0].mxu0
    %1102 = vdwg.mxu0
    %v1103 = vadd.f32 %v1100, %v529
    %1105 = vset.pattern.permute.xlu0 0
    %1106 = vperm.xlu0 %1105, %v928
    %v1107 = vpop.permute.xlu0 %1106
    %v1109 = vmul.f32 %v1107, %v311
    %v1110 = vmul.f32 %v1107, %v315
    %v1111 = vadd.f32 %v1029, %v1109
    %v1112 = vadd.f32 %v1031, %v1110
    %1113 = vset.pattern.permute.xlu0 1
    %1114 = vperm.xlu0 %1113, %v928
    %v1115 = vpop.permute.xlu0 %1114
    %v1117 = vmul.f32 %v1115, %v337
    %v1118 = vmul.f32 %v1115, %v341
    %v1119 = vadd.f32 %v1111, %v1117
    %v1120 = vadd.f32 %v1112, %v1118
    %v1121 = vadd.f32 %v1119, %v290
    %v1122 = vadd.f32 %v1120, %v291
    %v1123 = vadd.f32 %v928, %v1103
    %v1124 = vxor.u32 %v1121, 2147483648
    %v1125 = vxor.u32 %v1122, 2147483648
    %v1126 = vmul.f32 %v1124, 1.442695
    %v1127 = vpow.pop %v1126
    %v1128 = vmul.f32 %v1125, 1.442695
    %v1129 = vpow.pop %v1128
    %v1130 = vadd.f32 %v1127, 1.0
    %v1131 = vadd.f32 %v1129, 1.0
    %v1132 = vrcp.pop %v1130
    %v1133 = vmul.f32 1.0, %v1132
    %v1134 = vrcp.pop %v1131
    %v1135 = vmul.f32 1.0, %v1134
    %v1136 = vtanh.pop %v1122
    %v1137 = vmul.f32 %v1133, %v952
    %1139 = vrot.lane.b32.xlu0 %v1136, 64
    %v1140 = vpop.permute.xlu0 %1139
    %v1142 = vmul.f32 %v1133, %v1140
    %1144 = vrot.lane.b32.xlu0 %v1142, 64
    %v1145 = vpop.permute.xlu0 %1144
    %v1147 = vadd.f32 %v1137, %v1145
    %v1148 = vtanh.pop %v1147
    %1150 = vrot.lane.b32.xlu0 %v1148, 64
    %v1151 = vpop.permute.xlu0 %1150
    %v1153 = vmul.f32 %v1135, %v1151
    %v1155 = vsel %vm118, %v1153, 0
    %1157 = vmatprep.subr.mxu0 %v61
    %1158 = vmatpush1.msra.mxu0 %v60
    %1159 = vmatprep.subr.mxu0 %v64
    %1160 = vmatpush1.msra.mxu0 %v63
    %1161 = vmatprep.subr.mxu0 %v67
    %1162 = vmatpush1.msra.mxu0 %v66
    %1163 = vmatprep.subr.mxu0 %v70
    %1164 = vmatpush1.msra.mxu0 %v69
    %1165 = vmatprep.subr.mxu0 %v73
    %1166 = vmatpush1.msra.mxu0 %v72
    %1167 = vmatprep.subr.mxu0 %v76
    %1168 = vmatpush1.msra.mxu0 %v75
    %1169 = vmatprep.subr.mxu0 %v79
    %1170 = vmatpush1.msra.mxu0 %v78
    %1171 = vmatprep.subr.mxu0 %v82
    %1172 = vmatpush1.msra.mxu0 %v81
    %1173 = vmatprep.subr.mxu0 0.0
    %1174 = vmatpush1.msra.mxu0 0.0
    %1175 = vmatprep.subr.mxu0 0.0
    %1176 = vmatpush1.msra.mxu0 0.0
    %1177 = vmatprep.subr.mxu0 0.0
    %1178 = vmatpush1.msra.mxu0 0.0
    %1179 = vmatprep.subr.mxu0 0.0
    %1180 = vmatpush1.msra.mxu0 0.0
    %1181 = vmatprep.subr.mxu0 0.0
    %1182 = vmatpush1.msra.mxu0 0.0
    %1183 = vmatprep.subr.mxu0 0.0
    %1184 = vmatpush1.msra.mxu0 0.0
    %1185 = vmatprep.subr.mxu0 0.0
    %1186 = vmatpush1.msra.mxu0 0.0
    %1187 = vmatprep.subr.mxu0 0.0
    %1188 = vmatpush1.msra.mxu0 0.0
    %1189 = vmatprep.subr.mxu0 0.0
    %1190 = vmatpush1.msra.mxu0 0.0
    %1191 = vmatprep.subr.mxu0 0.0
    %1192 = vmatpush1.msra.mxu0 0.0
    %1193 = vmatprep.subr.mxu0 0.0
    %1194 = vmatpush1.msra.mxu0 0.0
    %1195 = vmatprep.subr.mxu0 0.0
    %1196 = vmatpush1.msra.mxu0 0.0
    %1197 = vmatprep.subr.mxu0 0.0
    %1198 = vmatpush1.msra.mxu0 0.0
    %1199 = vmatprep.subr.mxu0 0.0
    %1200 = vmatpush1.msra.mxu0 0.0
    %1201 = vmatprep.subr.mxu0 0.0
    %1202 = vmatpush1.msra.mxu0 0.0
    %1203 = vmatprep.subr.mxu0 0.0
    %1204 = vmatpush1.msra.mxu0 0.0
    %1205 = vmatprep.subr.mxu0 0.0
    %1206 = vmatpush1.msra.mxu0 0.0
    %1207 = vmatprep.subr.mxu0 0.0
    %1208 = vmatpush1.msra.mxu0 0.0
    %1209 = vmatprep.subr.mxu0 0.0
    %1210 = vmatpush1.msra.mxu0 0.0
    %1211 = vmatprep.subr.mxu0 0.0
    %1212 = vmatpush1.msra.mxu0 0.0
    %1213 = vmatprep.subr.mxu0 0.0
    %1214 = vmatpush1.msra.mxu0 0.0
    %1215 = vmatprep.subr.mxu0 0.0
    %1216 = vmatpush1.msra.mxu0 0.0
    %1217 = vmatprep.subr.mxu0 0.0
    %1218 = vmatpush1.msra.mxu0 0.0
    %1219 = vmatprep.subr.mxu0 0.0
    %1220 = vmatpush1.msra.mxu0 0.0
    %1221 = vmatprep.mubr.f32.mxu0 0.0
    %1222 = vmatmul.mubr.f32.gmra.mrb[0].mxu0 %v1155
    %v1223 = vpop.f32.mrb[0].mxu0
    %v1224 = vadd.f32 0.0, %v1223
    %v1225 = vpop.f32.mrb[0].mxu0
    %v1226 = vadd.f32 0.0, %v1225
    %1227 = vdwg.mxu0
    %1228 = vmatprep.subr.mxu0 0.0
    %1229 = vmatpush1.msra.mxu0 %v62
    %1230 = vmatprep.subr.mxu0 0.0
    %1231 = vmatpush1.msra.mxu0 %v65
    %1232 = vmatprep.subr.mxu0 0.0
    %1233 = vmatpush1.msra.mxu0 %v68
    %1234 = vmatprep.subr.mxu0 0.0
    %1235 = vmatpush1.msra.mxu0 %v71
    %1236 = vmatprep.subr.mxu0 0.0
    %1237 = vmatpush1.msra.mxu0 %v74
    %1238 = vmatprep.subr.mxu0 0.0
    %1239 = vmatpush1.msra.mxu0 %v77
    %1240 = vmatprep.subr.mxu0 0.0
    %1241 = vmatpush1.msra.mxu0 %v80
    %1242 = vmatprep.subr.mxu0 0.0
    %1243 = vmatpush1.msra.mxu0 %v83
    %1244 = vmatprep.subr.mxu0 0.0
    %1245 = vmatpush1.msra.mxu0 0.0
    %1246 = vmatprep.subr.mxu0 0.0
    %1247 = vmatpush1.msra.mxu0 0.0
    %1248 = vmatprep.subr.mxu0 0.0
    %1249 = vmatpush1.msra.mxu0 0.0
    %1250 = vmatprep.subr.mxu0 0.0
    %1251 = vmatpush1.msra.mxu0 0.0
    %1252 = vmatprep.subr.mxu0 0.0
    %1253 = vmatpush1.msra.mxu0 0.0
    %1254 = vmatprep.subr.mxu0 0.0
    %1255 = vmatpush1.msra.mxu0 0.0
    %1256 = vmatprep.subr.mxu0 0.0
    %1257 = vmatpush1.msra.mxu0 0.0
    %1258 = vmatprep.subr.mxu0 0.0
    %1259 = vmatpush1.msra.mxu0 0.0
    %1260 = vmatprep.subr.mxu0 0.0
    %1261 = vmatpush1.msra.mxu0 0.0
    %1262 = vmatprep.subr.mxu0 0.0
    %1263 = vmatpush1.msra.mxu0 0.0
    %1264 = vmatprep.subr.mxu0 0.0
    %1265 = vmatpush1.msra.mxu0 0.0
    %1266 = vmatprep.subr.mxu0 0.0
    %1267 = vmatpush1.msra.mxu0 0.0
    %1268 = vmatprep.subr.mxu0 0.0
    %1269 = vmatpush1.msra.mxu0 0.0
    %1270 = vmatprep.subr.mxu0 0.0
    %1271 = vmatpush1.msra.mxu0 0.0
    %1272 = vmatprep.subr.mxu0 0.0
    %1273 = vmatpush1.msra.mxu0 0.0
    %1274 = vmatprep.subr.mxu0 0.0
    %1275 = vmatpush1.msra.mxu0 0.0
    %1276 = vmatprep.subr.mxu0 0.0
    %1277 = vmatpush1.msra.mxu0 0.0
    %1278 = vmatprep.subr.mxu0 0.0
    %1279 = vmatpush1.msra.mxu0 0.0
    %1280 = vmatprep.subr.mxu0 0.0
    %1281 = vmatpush1.msra.mxu0 0.0
    %1282 = vmatprep.subr.mxu0 0.0
    %1283 = vmatpush1.msra.mxu0 0.0
    %1284 = vmatprep.subr.mxu0 0.0
    %1285 = vmatpush1.msra.mxu0 0.0
    %1286 = vmatprep.subr.mxu0 0.0
    %1287 = vmatpush1.msra.mxu0 0.0
    %1288 = vmatprep.subr.mxu0 0.0
    %1289 = vmatpush1.msra.mxu0 0.0
    %1290 = vmatprep.subr.mxu0 0.0
    %1291 = vmatpush1.msra.mxu0 0.0
    %1292 = vmatprep.mubr.f32.mxu0 0.0
    %1293 = vmatmul.mubr.f32.gmra.mrb[0].mxu0 %v1155
    %v1294 = vpop.f32.mrb[0].mxu0
    %v1295 = vadd.f32 0.0, %v1294
    %v1296 = vpop.f32.mrb[0].mxu0
    %1297 = vdwg.mxu0
    %v1298 = vadd.f32 %v1295, %v529
    %1300 = vset.pattern.permute.xlu0 0
    %1301 = vperm.xlu0 %1300, %v1123
    %v1302 = vpop.permute.xlu0 %1301
    %v1304 = vmul.f32 %v1302, %v311
    %v1305 = vmul.f32 %v1302, %v315
    %v1306 = vadd.f32 %v1224, %v1304
    %v1307 = vadd.f32 %v1226, %v1305
    %1308 = vset.pattern.permute.xlu0 1
    %1309 = vperm.xlu0 %1308, %v1123
    %v1310 = vpop.permute.xlu0 %1309
    %v1312 = vmul.f32 %v1310, %v337
    %v1313 = vmul.f32 %v1310, %v341
    %v1314 = vadd.f32 %v1306, %v1312
    %v1315 = vadd.f32 %v1307, %v1313
    %v1316 = vadd.f32 %v1314, %v290
    %v1317 = vadd.f32 %v1315, %v291
    %v1318 = vadd.f32 %v1123, %v1298
    %v1319 = vxor.u32 %v1316, 2147483648
    %v1320 = vxor.u32 %v1317, 2147483648
    %v1321 = vmul.f32 %v1319, 1.442695
    %v1322 = vpow.pop %v1321
    %v1323 = vmul.f32 %v1320, 1.442695
    %v1324 = vpow.pop %v1323
    %v1325 = vadd.f32 %v1322, 1.0
    %v1326 = vadd.f32 %v1324, 1.0
    %v1327 = vrcp.pop %v1325
    %v1328 = vmul.f32 1.0, %v1327
    %v1329 = vrcp.pop %v1326
    %v1330 = vmul.f32 1.0, %v1329
    %v1331 = vtanh.pop %v1317
    %v1332 = vmul.f32 %v1328, %v1147
    %1334 = vrot.lane.b32.xlu0 %v1331, 64
    %v1335 = vpop.permute.xlu0 %1334
    %v1337 = vmul.f32 %v1328, %v1335
    %1339 = vrot.lane.b32.xlu0 %v1337, 64
    %v1340 = vpop.permute.xlu0 %1339
    %v1342 = vadd.f32 %v1332, %v1340
    %v1343 = vtanh.pop %v1342
    %1345 = vrot.lane.b32.xlu0 %v1343, 64
    %v1346 = vpop.permute.xlu0 %1345
    %v1348 = vmul.f32 %v1330, %v1346
    %v1350 = vsel %vm118, %v1348, 0
    %1352 = vmatprep.subr.mxu0 %v61
    %1353 = vmatpush1.msra.mxu0 %v60
    %1354 = vmatprep.subr.mxu0 %v64
    %1355 = vmatpush1.msra.mxu0 %v63
    %1356 = vmatprep.subr.mxu0 %v67
    %1357 = vmatpush1.msra.mxu0 %v66
    %1358 = vmatprep.subr.mxu0 %v70
    %1359 = vmatpush1.msra.mxu0 %v69
    %1360 = vmatprep.subr.mxu0 %v73
    %1361 = vmatpush1.msra.mxu0 %v72
    %1362 = vmatprep.subr.mxu0 %v76
    %1363 = vmatpush1.msra.mxu0 %v75
    %1364 = vmatprep.subr.mxu0 %v79
    %1365 = vmatpush1.msra.mxu0 %v78
    %1366 = vmatprep.subr.mxu0 %v82
    %1367 = vmatpush1.msra.mxu0 %v81
    %1368 = vmatprep.subr.mxu0 0.0
    %1369 = vmatpush1.msra.mxu0 0.0
    %1370 = vmatprep.subr.mxu0 0.0
    %1371 = vmatpush1.msra.mxu0 0.0
    %1372 = vmatprep.subr.mxu0 0.0
    %1373 = vmatpush1.msra.mxu0 0.0
    %1374 = vmatprep.subr.mxu0 0.0
    %1375 = vmatpush1.msra.mxu0 0.0
    %1376 = vmatprep.subr.mxu0 0.0
    %1377 = vmatpush1.msra.mxu0 0.0
    %1378 = vmatprep.subr.mxu0 0.0
    %1379 = vmatpush1.msra.mxu0 0.0
    %1380 = vmatprep.subr.mxu0 0.0
    %1381 = vmatpush1.msra.mxu0 0.0
    %1382 = vmatprep.subr.mxu0 0.0
    %1383 = vmatpush1.msra.mxu0 0.0
    %1384 = vmatprep.subr.mxu0 0.0
    %1385 = vmatpush1.msra.mxu0 0.0
    %1386 = vmatprep.subr.mxu0 0.0
    %1387 = vmatpush1.msra.mxu0 0.0
    %1388 = vmatprep.subr.mxu0 0.0
    %1389 = vmatpush1.msra.mxu0 0.0
    %1390 = vmatprep.subr.mxu0 0.0
    %1391 = vmatpush1.msra.mxu0 0.0
    %1392 = vmatprep.subr.mxu0 0.0
    %1393 = vmatpush1.msra.mxu0 0.0
    %1394 = vmatprep.subr.mxu0 0.0
    %1395 = vmatpush1.msra.mxu0 0.0
    %1396 = vmatprep.subr.mxu0 0.0
    %1397 = vmatpush1.msra.mxu0 0.0
    %1398 = vmatprep.subr.mxu0 0.0
    %1399 = vmatpush1.msra.mxu0 0.0
    %1400 = vmatprep.subr.mxu0 0.0
    %1401 = vmatpush1.msra.mxu0 0.0
    %1402 = vmatprep.subr.mxu0 0.0
    %1403 = vmatpush1.msra.mxu0 0.0
    %1404 = vmatprep.subr.mxu0 0.0
    %1405 = vmatpush1.msra.mxu0 0.0
    %1406 = vmatprep.subr.mxu0 0.0
    %1407 = vmatpush1.msra.mxu0 0.0
    %1408 = vmatprep.subr.mxu0 0.0
    %1409 = vmatpush1.msra.mxu0 0.0
    %1410 = vmatprep.subr.mxu0 0.0
    %1411 = vmatpush1.msra.mxu0 0.0
    %1412 = vmatprep.subr.mxu0 0.0
    %1413 = vmatpush1.msra.mxu0 0.0
    %1414 = vmatprep.subr.mxu0 0.0
    %1415 = vmatpush1.msra.mxu0 0.0
    %1416 = vmatprep.mubr.f32.mxu0 0.0
    %1417 = vmatmul.mubr.f32.gmra.mrb[0].mxu0 %v1350
    %v1418 = vpop.f32.mrb[0].mxu0
    %v1419 = vadd.f32 0.0, %v1418
    %v1420 = vpop.f32.mrb[0].mxu0
    %v1421 = vadd.f32 0.0, %v1420
    %1422 = vdwg.mxu0
    %1423 = vmatprep.subr.mxu0 0.0
    %1424 = vmatpush1.msra.mxu0 %v62
    %1425 = vmatprep.subr.mxu0 0.0
    %1426 = vmatpush1.msra.mxu0 %v65
    %1427 = vmatprep.subr.mxu0 0.0
    %1428 = vmatpush1.msra.mxu0 %v68
    %1429 = vmatprep.subr.mxu0 0.0
    %1430 = vmatpush1.msra.mxu0 %v71
    %1431 = vmatprep.subr.mxu0 0.0
    %1432 = vmatpush1.msra.mxu0 %v74
    %1433 = vmatprep.subr.mxu0 0.0
    %1434 = vmatpush1.msra.mxu0 %v77
    %1435 = vmatprep.subr.mxu0 0.0
    %1436 = vmatpush1.msra.mxu0 %v80
    %1437 = vmatprep.subr.mxu0 0.0
    %1438 = vmatpush1.msra.mxu0 %v83
    %1439 = vmatprep.subr.mxu0 0.0
    %1440 = vmatpush1.msra.mxu0 0.0
    %1441 = vmatprep.subr.mxu0 0.0
    %1442 = vmatpush1.msra.mxu0 0.0
    %1443 = vmatprep.subr.mxu0 0.0
    %1444 = vmatpush1.msra.mxu0 0.0
    %1445 = vmatprep.subr.mxu0 0.0
    %1446 = vmatpush1.msra.mxu0 0.0
    %1447 = vmatprep.subr.mxu0 0.0
    %1448 = vmatpush1.msra.mxu0 0.0
    %1449 = vmatprep.subr.mxu0 0.0
    %1450 = vmatpush1.msra.mxu0 0.0
    %1451 = vmatprep.subr.mxu0 0.0
    %1452 = vmatpush1.msra.mxu0 0.0
    %1453 = vmatprep.subr.mxu0 0.0
    %1454 = vmatpush1.msra.mxu0 0.0
    %1455 = vmatprep.subr.mxu0 0.0
    %1456 = vmatpush1.msra.mxu0 0.0
    %1457 = vmatprep.subr.mxu0 0.0
    %1458 = vmatpush1.msra.mxu0 0.0
    %1459 = vmatprep.subr.mxu0 0.0
    %1460 = vmatpush1.msra.mxu0 0.0
    %1461 = vmatprep.subr.mxu0 0.0
    %1462 = vmatpush1.msra.mxu0 0.0
    %1463 = vmatprep.subr.mxu0 0.0
    %1464 = vmatpush1.msra.mxu0 0.0
    %1465 = vmatprep.subr.mxu0 0.0
    %1466 = vmatpush1.msra.mxu0 0.0
    %1467 = vmatprep.subr.mxu0 0.0
    %1468 = vmatpush1.msra.mxu0 0.0
    %1469 = vmatprep.subr.mxu0 0.0
    %1470 = vmatpush1.msra.mxu0 0.0
    %1471 = vmatprep.subr.mxu0 0.0
    %1472 = vmatpush1.msra.mxu0 0.0
    %1473 = vmatprep.subr.mxu0 0.0
    %1474 = vmatpush1.msra.mxu0 0.0
    %1475 = vmatprep.subr.mxu0 0.0
    %1476 = vmatpush1.msra.mxu0 0.0
    %1477 = vmatprep.subr.mxu0 0.0
    %1478 = vmatpush1.msra.mxu0 0.0
    %1479 = vmatprep.subr.mxu0 0.0
    %1480 = vmatpush1.msra.mxu0 0.0
    %1481 = vmatprep.subr.mxu0 0.0
    %1482 = vmatpush1.msra.mxu0 0.0
    %1483 = vmatprep.subr.mxu0 0.0
    %1484 = vmatpush1.msra.mxu0 0.0
    %1485 = vmatprep.subr.mxu0 0.0
    %1486 = vmatpush1.msra.mxu0 0.0
    %1487 = vmatprep.mubr.f32.mxu0 0.0
    %1488 = vmatmul.mubr.f32.gmra.mrb[0].mxu0 %v1350
    %v1489 = vpop.f32.mrb[0].mxu0
    %v1490 = vadd.f32 0.0, %v1489
    %v1491 = vpop.f32.mrb[0].mxu0
    %1492 = vdwg.mxu0
    %v1493 = vadd.f32 %v1490, %v529
    %1495 = vset.pattern.permute.xlu0 0
    %1496 = vperm.xlu0 %1495, %v1318
    %v1497 = vpop.permute.xlu0 %1496
    %v1499 = vmul.f32 %v1497, %v311
    %v1500 = vmul.f32 %v1497, %v315
    %v1501 = vadd.f32 %v1419, %v1499
    %v1502 = vadd.f32 %v1421, %v1500
    %1503 = vset.pattern.permute.xlu0 1
    %1504 = vperm.xlu0 %1503, %v1318
    %v1505 = vpop.permute.xlu0 %1504
    %v1507 = vmul.f32 %v1505, %v337
    %v1508 = vmul.f32 %v1505, %v341
    %v1509 = vadd.f32 %v1501, %v1507
    %v1510 = vadd.f32 %v1502, %v1508
    %v1511 = vadd.f32 %v1509, %v290
    %v1512 = vadd.f32 %v1510, %v291
    %v1513 = vadd.f32 %v1318, %v1493
    %v1514 = vxor.u32 %v1511, 2147483648
    %v1515 = vxor.u32 %v1512, 2147483648
    %v1516 = vmul.f32 %v1514, 1.442695
    %v1517 = vpow.pop %v1516
    %v1518 = vmul.f32 %v1515, 1.442695
    %v1519 = vpow.pop %v1518
    %v1520 = vadd.f32 %v1517, 1.0
    %v1521 = vadd.f32 %v1519, 1.0
    %v1522 = vrcp.pop %v1520
    %v1523 = vmul.f32 1.0, %v1522
    %v1524 = vrcp.pop %v1521
    %v1525 = vmul.f32 1.0, %v1524
    %v1526 = vtanh.pop %v1512
    %v1527 = vmul.f32 %v1523, %v1342
    %1529 = vrot.lane.b32.xlu0 %v1526, 64
    %v1530 = vpop.permute.xlu0 %1529
    %v1532 = vmul.f32 %v1523, %v1530
    %1534 = vrot.lane.b32.xlu0 %v1532, 64
    %v1535 = vpop.permute.xlu0 %1534
    %v1537 = vadd.f32 %v1527, %v1535
    %v1538 = vtanh.pop %v1537
    %1540 = vrot.lane.b32.xlu0 %v1538, 64
    %v1541 = vpop.permute.xlu0 %1540
    %v1543 = vmul.f32 %v1525, %v1541
    %v1545 = vsel %vm118, %v1543, 0
    %1547 = vmatprep.subr.mxu0 %v61
    %1548 = vmatpush1.msra.mxu0 %v60
    %1549 = vmatprep.subr.mxu0 %v64
    %1550 = vmatpush1.msra.mxu0 %v63
    %1551 = vmatprep.subr.mxu0 %v67
    %1552 = vmatpush1.msra.mxu0 %v66
    %1553 = vmatprep.subr.mxu0 %v70
    %1554 = vmatpush1.msra.mxu0 %v69
    %1555 = vmatprep.subr.mxu0 %v73
    %1556 = vmatpush1.msra.mxu0 %v72
    %1557 = vmatprep.subr.mxu0 %v76
    %1558 = vmatpush1.msra.mxu0 %v75
    %1559 = vmatprep.subr.mxu0 %v79
    %1560 = vmatpush1.msra.mxu0 %v78
    %1561 = vmatprep.subr.mxu0 %v82
    %1562 = vmatpush1.msra.mxu0 %v81
    %1563 = vmatprep.subr.mxu0 0.0
    %1564 = vmatpush1.msra.mxu0 0.0
    %1565 = vmatprep.subr.mxu0 0.0
    %1566 = vmatpush1.msra.mxu0 0.0
    %1567 = vmatprep.subr.mxu0 0.0
    %1568 = vmatpush1.msra.mxu0 0.0
    %1569 = vmatprep.subr.mxu0 0.0
    %1570 = vmatpush1.msra.mxu0 0.0
    %1571 = vmatprep.subr.mxu0 0.0
    %1572 = vmatpush1.msra.mxu0 0.0
    %1573 = vmatprep.subr.mxu0 0.0
    %1574 = vmatpush1.msra.mxu0 0.0
    %1575 = vmatprep.subr.mxu0 0.0
    %1576 = vmatpush1.msra.mxu0 0.0
    %1577 = vmatprep.subr.mxu0 0.0
    %1578 = vmatpush1.msra.mxu0 0.0
    %1579 = vmatprep.subr.mxu0 0.0
    %1580 = vmatpush1.msra.mxu0 0.0
    %1581 = vmatprep.subr.mxu0 0.0
    %1582 = vmatpush1.msra.mxu0 0.0
    %1583 = vmatprep.subr.mxu0 0.0
    %1584 = vmatpush1.msra.mxu0 0.0
    %1585 = vmatprep.subr.mxu0 0.0
    %1586 = vmatpush1.msra.mxu0 0.0
    %1587 = vmatprep.subr.mxu0 0.0
    %1588 = vmatpush1.msra.mxu0 0.0
    %1589 = vmatprep.subr.mxu0 0.0
    %1590 = vmatpush1.msra.mxu0 0.0
    %1591 = vmatprep.subr.mxu0 0.0
    %1592 = vmatpush1.msra.mxu0 0.0
    %1593 = vmatprep.subr.mxu0 0.0
    %1594 = vmatpush1.msra.mxu0 0.0
    %1595 = vmatprep.subr.mxu0 0.0
    %1596 = vmatpush1.msra.mxu0 0.0
    %1597 = vmatprep.subr.mxu0 0.0
    %1598 = vmatpush1.msra.mxu0 0.0
    %1599 = vmatprep.subr.mxu0 0.0
    %1600 = vmatpush1.msra.mxu0 0.0
    %1601 = vmatprep.subr.mxu0 0.0
    %1602 = vmatpush1.msra.mxu0 0.0
    %1603 = vmatprep.subr.mxu0 0.0
    %1604 = vmatpush1.msra.mxu0 0.0
    %1605 = vmatprep.subr.mxu0 0.0
    %1606 = vmatpush1.msra.mxu0 0.0
    %1607 = vmatprep.subr.mxu0 0.0
    %1608 = vmatpush1.msra.mxu0 0.0
    %1609 = vmatprep.subr.mxu0 0.0
    %1610 = vmatpush1.msra.mxu0 0.0
    %1611 = vmatprep.mubr.f32.mxu0 0.0
    %1612 = vmatmul.mubr.f32.gmra.mrb[0].mxu0 %v1545
    %v1613 = vpop.f32.mrb[0].mxu0
    %v1614 = vadd.f32 0.0, %v1613
    %v1615 = vpop.f32.mrb[0].mxu0
    %v1616 = vadd.f32 0.0, %v1615
    %1617 = vdwg.mxu0
    %1618 = vmatprep.subr.mxu0 0.0
    %1619 = vmatpush1.msra.mxu0 %v62
    %1620 = vmatprep.subr.mxu0 0.0
    %1621 = vmatpush1.msra.mxu0 %v65
    %1622 = vmatprep.subr.mxu0 0.0
    %1623 = vmatpush1.msra.mxu0 %v68
    %1624 = vmatprep.subr.mxu0 0.0
    %1625 = vmatpush1.msra.mxu0 %v71
    %1626 = vmatprep.subr.mxu0 0.0
    %1627 = vmatpush1.msra.mxu0 %v74
    %1628 = vmatprep.subr.mxu0 0.0
    %1629 = vmatpush1.msra.mxu0 %v77
    %1630 = vmatprep.subr.mxu0 0.0
    %1631 = vmatpush1.msra.mxu0 %v80
    %1632 = vmatprep.subr.mxu0 0.0
    %1633 = vmatpush1.msra.mxu0 %v83
    %1634 = vmatprep.subr.mxu0 0.0
    %1635 = vmatpush1.msra.mxu0 0.0
    %1636 = vmatprep.subr.mxu0 0.0
    %1637 = vmatpush1.msra.mxu0 0.0
    %1638 = vmatprep.subr.mxu0 0.0
    %1639 = vmatpush1.msra.mxu0 0.0
    %1640 = vmatprep.subr.mxu0 0.0
    %1641 = vmatpush1.msra.mxu0 0.0
    %1642 = vmatprep.subr.mxu0 0.0
    %1643 = vmatpush1.msra.mxu0 0.0
    %1644 = vmatprep.subr.mxu0 0.0
    %1645 = vmatpush1.msra.mxu0 0.0
    %1646 = vmatprep.subr.mxu0 0.0
    %1647 = vmatpush1.msra.mxu0 0.0
    %1648 = vmatprep.subr.mxu0 0.0
    %1649 = vmatpush1.msra.mxu0 0.0
    %1650 = vmatprep.subr.mxu0 0.0
    %1651 = vmatpush1.msra.mxu0 0.0
    %1652 = vmatprep.subr.mxu0 0.0
    %1653 = vmatpush1.msra.mxu0 0.0
    %1654 = vmatprep.subr.mxu0 0.0
    %1655 = vmatpush1.msra.mxu0 0.0
    %1656 = vmatprep.subr.mxu0 0.0
    %1657 = vmatpush1.msra.mxu0 0.0
    %1658 = vmatprep.subr.mxu0 0.0
    %1659 = vmatpush1.msra.mxu0 0.0
    %1660 = vmatprep.subr.mxu0 0.0
    %1661 = vmatpush1.msra.mxu0 0.0
    %1662 = vmatprep.subr.mxu0 0.0
    %1663 = vmatpush1.msra.mxu0 0.0
    %1664 = vmatprep.subr.mxu0 0.0
    %1665 = vmatpush1.msra.mxu0 0.0
    %1666 = vmatprep.subr.mxu0 0.0
    %1667 = vmatpush1.msra.mxu0 0.0
    %1668 = vmatprep.subr.mxu0 0.0
    %1669 = vmatpush1.msra.mxu0 0.0
    %1670 = vmatprep.subr.mxu0 0.0
    %1671 = vmatpush1.msra.mxu0 0.0
    %1672 = vmatprep.subr.mxu0 0.0
    %1673 = vmatpush1.msra.mxu0 0.0
    %1674 = vmatprep.subr.mxu0 0.0
    %1675 = vmatpush1.msra.mxu0 0.0
    %1676 = vmatprep.subr.mxu0 0.0
    %1677 = vmatpush1.msra.mxu0 0.0
    %1678 = vmatprep.subr.mxu0 0.0
    %1679 = vmatpush1.msra.mxu0 0.0
    %1680 = vmatprep.subr.mxu0 0.0
    %1681 = vmatpush1.msra.mxu0 0.0
    %1682 = vmatprep.mubr.f32.mxu0 0.0
    %1683 = vmatmul.mubr.f32.gmra.mrb[0].mxu0 %v1545
    %v1684 = vpop.f32.mrb[0].mxu0
    %v1685 = vadd.f32 0.0, %v1684
    %v1686 = vpop.f32.mrb[0].mxu0
    %1687 = vdwg.mxu0
    %v1688 = vadd.f32 %v1685, %v529
    %1690 = vset.pattern.permute.xlu0 0
    %1691 = vperm.xlu0 %1690, %v1513
    %v1692 = vpop.permute.xlu0 %1691
    %v1694 = vmul.f32 %v1692, %v311
    %v1695 = vmul.f32 %v1692, %v315
    %v1696 = vadd.f32 %v1614, %v1694
    %v1697 = vadd.f32 %v1616, %v1695
    %1698 = vset.pattern.permute.xlu0 1
    %1699 = vperm.xlu0 %1698, %v1513
    %v1700 = vpop.permute.xlu0 %1699
    %v1702 = vmul.f32 %v1700, %v337
    %v1703 = vmul.f32 %v1700, %v341
    %v1704 = vadd.f32 %v1696, %v1702
    %v1705 = vadd.f32 %v1697, %v1703
    %v1706 = vadd.f32 %v1704, %v290
    %v1707 = vadd.f32 %v1705, %v291
    %v1708 = vadd.f32 %v1513, %v1688
    %v1709 = vxor.u32 %v1706, 2147483648
    %v1710 = vxor.u32 %v1707, 2147483648
    %v1711 = vmul.f32 %v1709, 1.442695
    %v1712 = vpow.pop %v1711
    %v1713 = vmul.f32 %v1710, 1.442695
    %v1714 = vpow.pop %v1713
    %v1715 = vadd.f32 %v1712, 1.0
    %v1716 = vadd.f32 %v1714, 1.0
    %v1717 = vrcp.pop %v1715
    %v1718 = vmul.f32 1.0, %v1717
    %v1719 = vrcp.pop %v1716
    %v1720 = vmul.f32 1.0, %v1719
    %v1721 = vtanh.pop %v1707
    %v1722 = vmul.f32 %v1718, %v1537
    %1724 = vrot.lane.b32.xlu0 %v1721, 64
    %v1725 = vpop.permute.xlu0 %1724
    %v1727 = vmul.f32 %v1718, %v1725
    %1729 = vrot.lane.b32.xlu0 %v1727, 64
    %v1730 = vpop.permute.xlu0 %1729
    %v1732 = vadd.f32 %v1722, %v1730
    %v1733 = vtanh.pop %v1732
    %1735 = vrot.lane.b32.xlu0 %v1733, 64
    %v1736 = vpop.permute.xlu0 %1735
    %v1738 = vmul.f32 %v1720, %v1736
    %v1740 = vsel %vm118, %v1738, 0
    %1742 = vmatprep.subr.mxu0 0.0
    %1743 = vmatpush1.msra.mxu0 %v62
    %1744 = vmatprep.subr.mxu0 0.0
    %1745 = vmatpush1.msra.mxu0 %v65
    %1746 = vmatprep.subr.mxu0 0.0
    %1747 = vmatpush1.msra.mxu0 %v68
    %1748 = vmatprep.subr.mxu0 0.0
    %1749 = vmatpush1.msra.mxu0 %v71
    %1750 = vmatprep.subr.mxu0 0.0
    %1751 = vmatpush1.msra.mxu0 %v74
    %1752 = vmatprep.subr.mxu0 0.0
    %1753 = vmatpush1.msra.mxu0 %v77
    %1754 = vmatprep.subr.mxu0 0.0
    %1755 = vmatpush1.msra.mxu0 %v80
    %1756 = vmatprep.subr.mxu0 0.0
    %1757 = vmatpush1.msra.mxu0 %v83
    %1758 = vmatprep.subr.mxu0 0.0
    %1759 = vmatpush1.msra.mxu0 0.0
    %1760 = vmatprep.subr.mxu0 0.0
    %1761 = vmatpush1.msra.mxu0 0.0
    %1762 = vmatprep.subr.mxu0 0.0
    %1763 = vmatpush1.msra.mxu0 0.0
    %1764 = vmatprep.subr.mxu0 0.0
    %1765 = vmatpush1.msra.mxu0 0.0
    %1766 = vmatprep.subr.mxu0 0.0
    %1767 = vmatpush1.msra.mxu0 0.0
    %1768 = vmatprep.subr.mxu0 0.0
    %1769 = vmatpush1.msra.mxu0 0.0
    %1770 = vmatprep.subr.mxu0 0.0
    %1771 = vmatpush1.msra.mxu0 0.0
    %1772 = vmatprep.subr.mxu0 0.0
    %1773 = vmatpush1.msra.mxu0 0.0
    %1774 = vmatprep.subr.mxu0 0.0
    %1775 = vmatpush1.msra.mxu0 0.0
    %1776 = vmatprep.subr.mxu0 0.0
    %1777 = vmatpush1.msra.mxu0 0.0
    %1778 = vmatprep.subr.mxu0 0.0
    %1779 = vmatpush1.msra.mxu0 0.0
    %1780 = vmatprep.subr.mxu0 0.0
    %1781 = vmatpush1.msra.mxu0 0.0
    %1782 = vmatprep.subr.mxu0 0.0
    %1783 = vmatpush1.msra.mxu0 0.0
    %1784 = vmatprep.subr.mxu0 0.0
    %1785 = vmatpush1.msra.mxu0 0.0
    %1786 = vmatprep.subr.mxu0 0.0
    %1787 = vmatpush1.msra.mxu0 0.0
    %1788 = vmatprep.subr.mxu0 0.0
    %1789 = vmatpush1.msra.mxu0 0.0
    %1790 = vmatprep.subr.mxu0 0.0
    %1791 = vmatpush1.msra.mxu0 0.0
    %1792 = vmatprep.subr.mxu0 0.0
    %1793 = vmatpush1.msra.mxu0 0.0
    %1794 = vmatprep.subr.mxu0 0.0
    %1795 = vmatpush1.msra.mxu0 0.0
    %1796 = vmatprep.subr.mxu0 0.0
    %1797 = vmatpush1.msra.mxu0 0.0
    %1798 = vmatprep.subr.mxu0 0.0
    %1799 = vmatpush1.msra.mxu0 0.0
    %1800 = vmatprep.subr.mxu0 0.0
    %1801 = vmatpush1.msra.mxu0 0.0
    %1802 = vmatprep.subr.mxu0 0.0
    %1803 = vmatpush1.msra.mxu0 0.0
    %1804 = vmatprep.subr.mxu0 0.0
    %1805 = vmatpush1.msra.mxu0 0.0
    %1806 = vmatprep.mubr.f32.mxu0 0.0
    %1807 = vmatmul.mubr.f32.gmra.mrb[0].mxu0 %v1740
    %v1808 = vpop.f32.mrb[0].mxu0
    %v1809 = vadd.f32 0.0, %v1808
    %v1810 = vpop.f32.mrb[0].mxu0
    %1811 = vdwg.mxu0
    %v1812 = vadd.f32 %v1809, %v529
    %v1813 = vadd.f32 %v1708, %v1812
    %1815 = vrot.lane.b32.xlu0 %v531, 2
    %v1816 = vpop.permute.xlu0 %1815
    %1818 = vrot.lane.b32.xlu0 %v733, 4
    %v1819 = vpop.permute.xlu0 %1818
    %1822 = vrot.lane.b32.xlu0 %v713, 6
    %v1823 = vpop.permute.xlu0 %1822
    %1825 = vrot.lane.b32.xlu0 %v928, 8
    %v1826 = vpop.permute.xlu0 %1825
    %1829 = vrot.lane.b32.xlu0 %v908, 10
    %v1830 = vpop.permute.xlu0 %1829
    %1832 = vrot.lane.b32.xlu0 %v1123, 12
    %v1833 = vpop.permute.xlu0 %1832
    %1836 = vrot.lane.b32.xlu0 %v1103, 14
    %v1837 = vpop.permute.xlu0 %1836
    %1839 = vrot.lane.b32.xlu0 %v1318, 16
    %v1840 = vpop.permute.xlu0 %1839
    %1843 = vrot.lane.b32.xlu0 %v1298, 18
    %v1844 = vpop.permute.xlu0 %1843
    %1846 = vrot.lane.b32.xlu0 %v1513, 20
    %v1847 = vpop.permute.xlu0 %1846
    %1850 = vrot.lane.b32.xlu0 %v1493, 22
    %v1851 = vpop.permute.xlu0 %1850
    %1854 = vrot.lane.b32.xlu0 %v1708, 24
    %v1855 = vpop.permute.xlu0 %1854
    %1858 = vrot.lane.b32.xlu0 %v1688, 26
    %v1859 = vpop.permute.xlu0 %1858
    %1862 = vrot.lane.b32.xlu0 %v1813, 28
    %v1863 = vpop.permute.xlu0 %1862
    %1866 = vrot.lane.b32.xlu0 %v1812, 30
    %v1867 = vpop.permute.xlu0 %1866
    %vm1869 = vcmask 15360
    %v1870 = vsel %vm1869, %v538, %v1816
    %vm1871 = vcmask 31744
    %v1872 = vsel %vm1871, %v1870, %v1819
    %vm1873 = vcmask 48128
    %v1874 = vsel %vm1873, %v1872, %v1823
    %vm1875 = vcmask 64512
    %v1876 = vsel %vm1875, %v1874, %v1826
    %vm1877 = vcmask 80896
    %v1878 = vsel %vm1877, %v1876, %v1830
    %vm1879 = vcmask 97280
    %v1880 = vsel %vm1879, %v1878, %v1833
    %vm1881 = vcmask 113664
    %v1882 = vsel %vm1881, %v1880, %v1837
    %vm1883 = vcmask 130048
    %v1884 = vsel %vm1883, %v1882, %v1840
    %vm1885 = vcmask 146432
    %v1886 = vsel %vm1885, %v1884, %v1844
    %vm1887 = vcmask 162816
    %v1888 = vsel %vm1887, %v1886, %v1847
    %vm1889 = vcmask 179200
    %v1890 = vsel %vm1889, %v1888, %v1851
    %vm1891 = vcmask 195584
    %v1892 = vsel %vm1891, %v1890, %v1855
    %vm1893 = vcmask 211968
    %v1894 = vsel %vm1893, %v1892, %v1859
    %vm1895 = vcmask 228352
    %v1896 = vsel %vm1895, %v1894, %v1863
    %vm1897 = vcmask 244736
    %v1898 = vsel %vm1897, %v1896, %v1867
    %vm1899 = vcmask 261120
    %1900 = vst.msk [vmem:[#allocation7] sm:$0xff] %vm1899, %v1898
    // Predicated region
    $region42: #{tpu_custom_call.1} parent=1 // pred_check
      _
    $region43: #{tpu_custom_call.1} parent=1 // pred_check_branch
      %1902 = sbr.rel (0) target = $region45
    $region44: #{tpu_custom_call.1} parent=1 // pred_region
      %s1904 = ssub.s32 128, 128
      %1905 = vsyncadd [#allocation4], %s1904
      %s1907 = sshll.u32 [#allocation7], 4
      %s1908 = int_to_ptr.vmem [resolvable:$true] %s1907
      %1910 = dma.vmem_to_hbm [thread:$0]  %s1908, 128, %s8, [#allocation4]
    $region45: #{tpu_custom_call.1} parent=1 // pred_fallthru
      _
    // Predicated region
    $region46: #{tpu_custom_call.1} parent=1 // pred_check
      _
    $region47: #{tpu_custom_call.1} parent=1 // pred_check_branch
      %1912 = sbr.rel (0) target = $region49
    $region48: #{tpu_custom_call.1} parent=1 // pred_region
      %1913 = dma.done [#allocation4], 128
    $region49: #{tpu_custom_call.1} parent=1 // pred_fallthru
      _
    %1914 = vsyncpa [#allocation3], 1
    %1915 = vsyncpa [#allocation6], 1
    %1916 = vsyncpa [#allocation4], 1

</llo_original>
